<compile_context>
chip_gen: v7x
topology: tpu7x:2x2x1
jax: 0.10.0
libtpu: 0.0.40
codegen_flags: <defaults>
</compile_context>

<pallas_src>
import functools
import math

import jax
import jax.numpy as jnp
from jax import lax
from jax.experimental import pallas as pl
from jax.experimental.pallas import tpu as pltpu


def _round_up(x, m):
    return (x + m - 1) // m * m


def _bilstm_kernel(T, Bp, H,
                   x_ref, lens_ref, wih_ref, bih_ref, whh_ref,
                   wslotf_ref, wslotb_ref, bslot_ref, wint_ref, bint_ref,
                   slots_ref, intent_ref,
                   xproj_ref, hidf_ref, hidb_ref):
    H2, H4, H6 = 2 * H, 4 * H, 6 * H
    T1 = T - 1

    # ---- hoisted input projection (both directions, bwd time pre-reversed) --
    # [T*Bp, 2E] @ [2E, 8H] + [1, 8H] -> row block t holds fwd proj at time t
    # and bwd proj at time T-1-t, in gate-major column order [i|f|o|g], each
    # gate block laid out [fwd H | bwd H].
    xproj_ref[...] = (
        jnp.dot(x_ref[...], wih_ref[...], preferred_element_type=jnp.float32)
        + bih_ref[...])

    w_hh = whh_ref[...]                                   # [2H, 8H] block-diag

    # hoisted mask machinery (no per-iteration broadcasts)
    lens2h = jnp.broadcast_to(lens_ref[...], (Bp, H2))    # [Bp, 2H] int32
    lane = lax.broadcasted_iota(jnp.int32, (Bp, H2), 1)
    is_fwd = lane < H                                     # fwd lanes / bwd lanes

    zeros = jnp.zeros((Bp, H2), jnp.float32)

    # ---- fused fwd/bwd recurrence: step s handles t=s (fwd) and t=T-1-s ----
    def body(s, carry):
        hcat, ccat = carry                                # each [Bp, 2H]
        rf = pl.multiple_of(s * Bp, Bp)
        rb = pl.multiple_of((T1 - s) * Bp, Bp)

        # one contiguous xproj row-block load + ONE fused recurrent matmul
        gates = xproj_ref[pl.ds(rf, Bp), :] + jnp.dot(
            hcat, w_hh, preferred_element_type=jnp.float32)      # [Bp, 8H]

        # contiguous activation lane blocks: sigmoid(6H) + tanh(2H)
        sig = jax.nn.sigmoid(gates[:, :H6])
        g = jnp.tanh(gates[:, H6:])
        i = sig[:, :H2]
        f = sig[:, H2:H4]
        o = sig[:, H4:H6]

        c_new = f * ccat + i * g
        h_new = o * jnp.tanh(c_new)

        # validity: fwd lanes use t=s, bwd lanes use t=T-1-s
        t_eff = jnp.where(is_fwd, s, T1 - s)
        keep = t_eff < lens2h                             # [Bp, 2H] bool

        # padded positions write 0 so the slot head sees zeros there
        h_store = jnp.where(keep, h_new, 0.0)
        hidf_ref[pl.ds(rf, Bp), :] = h_store[:, :H]
        hidb_ref[pl.ds(rb, Bp), :] = h_store[:, H:]

        # carry freeze at t >= len (packed-LSTM "last hidden" semantics)
        return (jnp.where(keep, h_new, hcat), jnp.where(keep, c_new, ccat))

    hcat_last, _ = lax.fori_loop(0, T, body, (zeros, zeros), unroll=True)

    # ---- slot head: two lane-dense matmuls (one per direction plane) --------
    slots_ref[...] = (
        jnp.dot(hidf_ref[...], wslotf_ref[...], preferred_element_type=jnp.float32)
        + jnp.dot(hidb_ref[...], wslotb_ref[...], preferred_element_type=jnp.float32)
        + bslot_ref[...])

    # ---- intent head on cat(h_fwd_last, h_bwd_last) = hcat_last -------------
    intent_ref[...] = (
        jnp.dot(hcat_last, wint_ref[...], preferred_element_type=jnp.float32)
        + bint_ref[...])


def model_ias_bidirectional(utterance, seq_lengths, params):
    """utterance: [B, T] int32 token ids; seq_lengths: [B] int32."""
    emb_tab = params["embedding"]
    B, T = utterance.shape
    E = emb_tab.shape[1]
    H = params["w_hh_f"].shape[0]
    S = params["w_slot"].shape[1]
    I = params["w_int"].shape[1]

    Bp = _round_up(B, 8)        # full f32 sublane tiles
    Sp = _round_up(S, 128)      # lane-dense output stores
    Ip = _round_up(I, 128)

    # embedding gather (XLA glue), time-major, pad batch, and append the
    # time-reversed stream for the backward direction: x2[t] = [emb(t)|emb(T-1-t)]
    emb = emb_tab[utterance].astype(jnp.float32)                # [B, T, E]
    emb = jnp.transpose(emb, (1, 0, 2))                         # [T, B, E]
    emb = jnp.pad(emb, ((0, 0), (0, Bp - B), (0, 0)))           # [T, Bp, E]
    x2 = jnp.concatenate([emb, emb[::-1]], axis=-1).reshape(T * Bp, 2 * E)

    # lengths as a tiny [Bp, 1] int32 (padded batch rows get length 0)
    lens = jnp.pad(seq_lengths.astype(jnp.int32), (0, Bp - B)).reshape(Bp, 1)

    # ---- weight prep: gate-major fused layout [i(2H)|f(2H)|o(2H)|g(2H)] -----
    def split_gates(w):   # torch gate order (i, f, g, o)
        return w[..., :H], w[..., H:2 * H], w[..., 2 * H:3 * H], w[..., 3 * H:]

    i_f, f_f, g_f, o_f = split_gates(params["w_ih_f"])          # each [E, H]
    i_b, f_b, g_b, o_b = split_gates(params["w_ih_b"])
    Ze = jnp.zeros((E, H), jnp.float32)
    wih_big = jnp.concatenate([
        jnp.concatenate([i_f, Ze, f_f, Ze, o_f, Ze, g_f, Ze], axis=1),
        jnp.concatenate([Ze, i_b, Ze, f_b, Ze, o_b, Ze, g_b], axis=1)],
        axis=0)                                                 # [2E, 8H]

    bi_f, bf_f, bg_f, bo_f = split_gates(params["b_f"])
    bi_b, bf_b, bg_b, bo_b = split_gates(params["b_b"])
    b_big = jnp.concatenate(
        [bi_f, bi_b, bf_f, bf_b, bo_f, bo_b, bg_f, bg_b], axis=1)   # [1, 8H]

    hi_f, hf_f, hg_f, ho_f = split_gates(params["w_hh_f"])      # each [H, H]
    hi_b, hf_b, hg_b, ho_b = split_gates(params["w_hh_b"])
    Zh = jnp.zeros((H, H), jnp.float32)
    whh_fused = jnp.concatenate([
        jnp.concatenate([hi_f, Zh, hf_f, Zh, ho_f, Zh, hg_f, Zh], axis=1),
        jnp.concatenate([Zh, hi_b, Zh, hf_b, Zh, ho_b, Zh, hg_b], axis=1)],
        axis=0)                                                 # [2H, 8H]

    w_slot = params["w_slot"]                                   # [2H, S]
    wslot_f = jnp.pad(w_slot[:H], ((0, 0), (0, Sp - S)))
    wslot_b = jnp.pad(w_slot[H:], ((0, 0), (0, Sp - S)))
    b_slot = jnp.pad(params["b_slot"], ((0, 0), (0, Sp - S)))
    w_int = jnp.pad(params["w_int"], ((0, 0), (0, Ip - I)))
    b_int = jnp.pad(params["b_int"], ((0, 0), (0, Ip - I)))

    kernel = functools.partial(_bilstm_kernel, T, Bp, H)
    vmem = pl.BlockSpec(memory_space=pltpu.MemorySpace.VMEM)
    slots_flat, intent_p = pl.pallas_call(
        kernel,
        out_shape=(jax.ShapeDtypeStruct((T * Bp, Sp), jnp.float32),
                   jax.ShapeDtypeStruct((Bp, Ip), jnp.float32)),
        in_specs=[vmem] * 10,
        out_specs=(vmem, vmem),
        scratch_shapes=[pltpu.VMEM((T * Bp, 8 * H), jnp.float32),   # x_proj
                        pltpu.VMEM((T * Bp, H), jnp.float32),       # hidden fwd
                        pltpu.VMEM((T * Bp, H), jnp.float32)],      # hidden bwd
    )(x2, lens, wih_big, b_big, whh_fused,
      wslot_f, wslot_b, b_slot, w_int, b_int)

    slots = slots_flat.reshape(T, Bp, Sp)[:, :B, :S]     # [T, B, out_slot]
    slots = jnp.transpose(slots, (1, 2, 0))              # [B, out_slot, T]
    intent = intent_p[:B, :I]                            # [B, out_int]
    return slots, intent


def init_params(key, vocab_len, emb_size, hid_size, out_slot, out_int, pad_index=0):
    ks = jax.random.split(key, 13)

    def uni(k, shape, bound):
        return jax.random.uniform(k, shape, jnp.float32, -bound, bound)

    k_lstm = 1.0 / math.sqrt(hid_size)
    k_lin = 1.0 / math.sqrt(2 * hid_size)

    emb = jax.random.normal(ks[0], (vocab_len, emb_size), jnp.float32)
    emb = emb.at[pad_index].set(0.0)                      # padding_idx=0

    # LSTM weights stored transposed vs torch: [in, 4H], gate order i,f,g,o.
    w_ih_f = uni(ks[1], (emb_size, 4 * hid_size), k_lstm)
    w_hh_f = uni(ks[2], (hid_size, 4 * hid_size), k_lstm)
    b_f = uni(ks[3], (1, 4 * hid_size), k_lstm) + uni(ks[4], (1, 4 * hid_size), k_lstm)
    w_ih_b = uni(ks[5], (emb_size, 4 * hid_size), k_lstm)
    w_hh_b = uni(ks[6], (hid_size, 4 * hid_size), k_lstm)
    b_b = uni(ks[7], (1, 4 * hid_size), k_lstm) + uni(ks[8], (1, 4 * hid_size), k_lstm)

    w_slot = uni(ks[9], (2 * hid_size, out_slot), k_lin)   # Linear(2H, out_slot)
    b_slot = uni(ks[10], (1, out_slot), k_lin)
    w_int = uni(ks[11], (2 * hid_size, out_int), k_lin)    # Linear(2H, out_int)
    b_int = uni(ks[12], (1, out_int), k_lin)

    return dict(
        embedding=emb,
        w_ih_f=w_ih_f, w_hh_f=w_hh_f, b_f=b_f,
        w_ih_b=w_ih_b, w_hh_b=w_hh_b, b_b=b_b,
        w_slot=w_slot, b_slot=b_slot,
        w_int=w_int, b_int=b_int,
    )


def ref_forward(utterance, seq_lengths, params):
    """Pure-JAX reference mirroring the packed bi-LSTM semantics (gate order i,f,g,o)."""
    emb = params["embedding"][utterance].astype(jnp.float32)   # [B, T, E]
    B, T, _ = emb.shape
    H = params["w_hh_f"].shape[0]
    lens = seq_lengths.astype(jnp.int32)[:, None]

    def run(time_order, w_ih, w_hh, b):
        h = jnp.zeros((B, H), jnp.float32)
        c = jnp.zeros((B, H), jnp.float32)
        out = jnp.zeros((B, T, H), jnp.float32)
        for t in time_order:
            gates = emb[:, t, :] @ w_ih + h @ w_hh + b
            i = jax.nn.sigmoid(gates[:, :H])
            f = jax.nn.sigmoid(gates[:, H:2 * H])
            g = jnp.tanh(gates[:, 2 * H:3 * H])
            o = jax.nn.sigmoid(gates[:, 3 * H:])
            c_new = f * c + i * g
            h_new = o * jnp.tanh(c_new)
            mask = t < lens
            out = out.at[:, t].set(jnp.where(mask, h_new, 0.0))
            h = jnp.where(mask, h_new, h)
            c = jnp.where(mask, c_new, c)
        return out, h

    hf_out, hf_last = run(range(T), params["w_ih_f"], params["w_hh_f"], params["b_f"])
    hb_out, hb_last = run(range(T - 1, -1, -1),
                          params["w_ih_b"], params["w_hh_b"], params["b_b"])
    h_all = jnp.concatenate([hf_out, hb_out], axis=-1)          # [B, T, 2H]
    slots = h_all @ params["w_slot"] + params["b_slot"]
    h_last = jnp.concatenate([hf_last, hb_last], axis=-1)
    intent = h_last @ params["w_int"] + params["b_int"]
    return jnp.transpose(slots, (0, 2, 1)), intent


if __name__ == "__main__":
    hid_size, emb_size = 32, 16
    vocab_len, out_slot, out_int = 50, 10, 6
    B, T = 2, 8

    key = jax.random.PRNGKey(0)
    kp, ku = jax.random.split(key)
    params = init_params(kp, vocab_len, emb_size, hid_size, out_slot, out_int)

    utterance = jax.random.randint(ku, (B, T), 1, vocab_len, dtype=jnp.int32)
    seq_lengths = jnp.array([8, 5], dtype=jnp.int32)            # sorted descending
    t_idx = jnp.arange(T)[None, :]
    utterance = jnp.where(t_idx < seq_lengths[:, None], utterance, 0)  # pad_index=0

    slots, intent = model_ias_bidirectional(utterance, seq_lengths, params)
    slots = jax.block_until_ready(slots)
    intent = jax.block_until_ready(intent)

    slots_ref, intent_ref = ref_forward(utterance, seq_lengths, params)
    assert slots.shape == (B, out_slot, T)
    assert intent.shape == (B, out_int)
    assert jnp.allclose(slots, slots_ref, atol=1e-4, rtol=1e-4)
    assert jnp.allclose(intent, intent_ref, atol=1e-4, rtol=1e-4)

    print("KERNEL_OK")
</pallas_src>

<mosaic_0001>
module attributes {stable_mosaic.version = 11 : i64} {
  func.func @_bilstm_kernel(%arg0: memref<64x32xf32, #tpu.memory_space<vmem>>, %arg1: memref<8x1xi32, #tpu.memory_space<vmem>>, %arg2: memref<32x256xf32, #tpu.memory_space<vmem>>, %arg3: memref<1x256xf32, #tpu.memory_space<vmem>>, %arg4: memref<64x256xf32, #tpu.memory_space<vmem>>, %arg5: memref<32x128xf32, #tpu.memory_space<vmem>>, %arg6: memref<32x128xf32, #tpu.memory_space<vmem>>, %arg7: memref<1x128xf32, #tpu.memory_space<vmem>>, %arg8: memref<64x128xf32, #tpu.memory_space<vmem>>, %arg9: memref<1x128xf32, #tpu.memory_space<vmem>>, %arg10: memref<64x128xf32, #tpu.memory_space<vmem>>, %arg11: memref<8x128xf32, #tpu.memory_space<vmem>>, %arg12: memref<64x256xf32, #tpu.memory_space<vmem>>, %arg13: memref<64x32xf32, #tpu.memory_space<vmem>>, %arg14: memref<64x32xf32, #tpu.memory_space<vmem>>) attributes {dimension_semantics = [], scalar_prefetch = 0 : i64, scratch_operands = 3 : i64, tpu.core_type = #tpu.core_type<tc>} {
    %c0 = arith.constant 0 : index
    %c0_0 = arith.constant 0 : index
    %0 = vector.load %arg0[%c0, %c0_0] : memref<64x32xf32, #tpu.memory_space<vmem>>, vector<64x32xf32>
    %c0_1 = arith.constant 0 : index
    %c0_2 = arith.constant 0 : index
    %1 = vector.load %arg2[%c0_1, %c0_2] : memref<32x256xf32, #tpu.memory_space<vmem>>, vector<32x256xf32>
    %cst = arith.constant dense<0.000000e+00> : vector<64x256xf32>
    %2 = tpu.matmul %0, %1, %cst {dimension_numbers = #tpu.dot_dimension_numbers<[1], [0], [0], [1], [0, 0, 1, 1], [], []>} : vector<64x32xf32>, vector<32x256xf32>, vector<64x256xf32> -> vector<64x256xf32>
    %c0_3 = arith.constant 0 : index
    %c0_4 = arith.constant 0 : index
    %3 = vector.load %arg3[%c0_3, %c0_4] : memref<1x256xf32, #tpu.memory_space<vmem>>, vector<1x256xf32>
    %4 = vector.broadcast %3 : vector<1x256xf32> to vector<64x256xf32>
    %5 = arith.addf %2, %4 : vector<64x256xf32>
    %c0_5 = arith.constant 0 : index
    %c0_6 = arith.constant 0 : index
    %6 = vector.load %arg12[%c0_5, %c0_6] : memref<64x256xf32, #tpu.memory_space<vmem>>, vector<64x256xf32>
    tpu.vector_store %arg12[%c0_5, %c0_6], %5 {strides = array<i32>} : memref<64x256xf32, #tpu.memory_space<vmem>>, vector<64x256xf32>,
    %c0_7 = arith.constant 0 : index
    %c0_8 = arith.constant 0 : index
    %7 = vector.load %arg4[%c0_7, %c0_8] : memref<64x256xf32, #tpu.memory_space<vmem>>, vector<64x256xf32>
    %c0_9 = arith.constant 0 : index
    %c0_10 = arith.constant 0 : index
    %8 = vector.load %arg1[%c0_9, %c0_10] : memref<8x1xi32, #tpu.memory_space<vmem>>, vector<8x1xi32>
    %9 = vector.shape_cast %8 : vector<8x1xi32> to vector<8x1xi32>
    %10 = vector.broadcast %9 : vector<8x1xi32> to vector<8x64xi32>
    %11 = tpu.iota {dimensions = array<i32: 1>} : vector<8x64xi32>
    %c32_i32 = arith.constant 32 : i32
    %12 = vector.broadcast %c32_i32 : i32 to vector<8x64xi32>
    %13 = arith.cmpi slt, %11, %12 : vector<8x64xi32>
    %cst_11 = arith.constant 0.000000e+00 : f32
    %14 = vector.broadcast %cst_11 : f32 to vector<8x64xf32>
    %c0_i32 = arith.constant 0 : i32
    %c8_i32 = arith.constant 8 : i32
    %15 = arith.muli %c0_i32, %c8_i32 : i32
    %16 = tpu.assume_multiple %15, 8 : i32
    %c7_i32 = arith.constant 7 : i32
    %17 = arith.subi %c7_i32, %c0_i32 : i32
    %c8_i32_12 = arith.constant 8 : i32
    %18 = arith.muli %17, %c8_i32_12 : i32
    %19 = tpu.assume_multiple %18, 8 : i32
    %20 = arith.index_cast %16 : i32 to index
    %c0_13 = arith.constant 0 : index
    %21 = vector.load %arg12[%20, %c0_13] : memref<64x256xf32, #tpu.memory_space<vmem>>, vector<8x256xf32>
    %cst_14 = arith.constant dense<0.000000e+00> : vector<8x256xf32>
    %22 = tpu.matmul %14, %7, %cst_14 {dimension_numbers = #tpu.dot_dimension_numbers<[1], [0], [0], [1], [0, 0, 1, 1], [], []>} : vector<8x64xf32>, vector<64x256xf32>, vector<8x256xf32> -> vector<8x256xf32>
    %23 = arith.addf %21, %22 : vector<8x256xf32>
    %24 = vector.extract_strided_slice %23 {offsets = [0, 0], sizes = [8, 192], strides = [1, 1]} : vector<8x256xf32> to vector<8x192xf32>
    %25 = arith.negf %24 : vector<8x192xf32>
    %26 = math.exp %25 : vector<8x192xf32>
    %cst_15 = arith.constant 1.000000e+00 : f32
    %27 = vector.broadcast %cst_15 : f32 to vector<8x192xf32>
    %28 = arith.addf %27, %26 : vector<8x192xf32>
    %29 = arith.divf %27, %28 : vector<8x192xf32>
    %30 = vector.extract_strided_slice %23 {offsets = [0, 192], sizes = [8, 64], strides = [1, 1]} : vector<8x256xf32> to vector<8x64xf32>
    %31 = math.tanh %30 : vector<8x64xf32>
    %32 = vector.extract_strided_slice %29 {offsets = [0, 0], sizes = [8, 64], strides = [1, 1]} : vector<8x192xf32> to vector<8x64xf32>
    %33 = vector.extract_strided_slice %29 {offsets = [0, 64], sizes = [8, 64], strides = [1, 1]} : vector<8x192xf32> to vector<8x64xf32>
    %34 = vector.extract_strided_slice %29 {offsets = [0, 128], sizes = [8, 64], strides = [1, 1]} : vector<8x192xf32> to vector<8x64xf32>
    %35 = arith.mulf %33, %14 : vector<8x64xf32>
    %36 = arith.mulf %32, %31 : vector<8x64xf32>
    %37 = arith.addf %35, %36 : vector<8x64xf32>
    %38 = math.tanh %37 : vector<8x64xf32>
    %39 = arith.mulf %34, %38 : vector<8x64xf32>
    %c7_i32_16 = arith.constant 7 : i32
    %40 = arith.subi %c7_i32_16, %c0_i32 : i32
    %41 = vector.broadcast %c0_i32 : i32 to vector<8x64xi32>
    %42 = vector.broadcast %40 : i32 to vector<8x64xi32>
    %43 = arith.select %13, %41, %42 : vector<8x64xi1>, vector<8x64xi32>
    %44 = arith.cmpi slt, %43, %10 : vector<8x64xi32>
    %cst_17 = arith.constant 0.000000e+00 : f32
    %45 = vector.broadcast %cst_17 : f32 to vector<8x64xf32>
    %46 = arith.select %44, %39, %45 : vector<8x64xi1>, vector<8x64xf32>
    %47 = vector.extract_strided_slice %46 {offsets = [0, 0], sizes = [8, 32], strides = [1, 1]} : vector<8x64xf32> to vector<8x32xf32>
    %48 = arith.index_cast %16 : i32 to index
    %c0_18 = arith.constant 0 : index
    %49 = vector.load %arg13[%48, %c0_18] : memref<64x32xf32, #tpu.memory_space<vmem>>, vector<8x32xf32>
    tpu.vector_store %arg13[%48, %c0_18], %47 {strides = array<i32>} : memref<64x32xf32, #tpu.memory_space<vmem>>, vector<8x32xf32>,
    %50 = vector.extract_strided_slice %46 {offsets = [0, 32], sizes = [8, 32], strides = [1, 1]} : vector<8x64xf32> to vector<8x32xf32>
    %51 = arith.index_cast %19 : i32 to index
    %c0_19 = arith.constant 0 : index
    %52 = vector.load %arg14[%51, %c0_19] : memref<64x32xf32, #tpu.memory_space<vmem>>, vector<8x32xf32>
    tpu.vector_store %arg14[%51, %c0_19], %50 {strides = array<i32>} : memref<64x32xf32, #tpu.memory_space<vmem>>, vector<8x32xf32>,
    %53 = arith.select %44, %39, %14 : vector<8x64xi1>, vector<8x64xf32>
    %54 = arith.select %44, %37, %14 : vector<8x64xi1>, vector<8x64xf32>
    %c1_i32 = arith.constant 1 : i32
    %c8_i32_20 = arith.constant 8 : i32
    %55 = arith.muli %c1_i32, %c8_i32_20 : i32
    %56 = tpu.assume_multiple %55, 8 : i32
    %c7_i32_21 = arith.constant 7 : i32
    %57 = arith.subi %c7_i32_21, %c1_i32 : i32
    %c8_i32_22 = arith.constant 8 : i32
    %58 = arith.muli %57, %c8_i32_22 : i32
    %59 = tpu.assume_multiple %58, 8 : i32
    %60 = arith.index_cast %56 : i32 to index
    %c0_23 = arith.constant 0 : index
    %61 = vector.load %arg12[%60, %c0_23] : memref<64x256xf32, #tpu.memory_space<vmem>>, vector<8x256xf32>
    %cst_24 = arith.constant dense<0.000000e+00> : vector<8x256xf32>
    %62 = tpu.matmul %53, %7, %cst_24 {dimension_numbers = #tpu.dot_dimension_numbers<[1], [0], [0], [1], [0, 0, 1, 1], [], []>} : vector<8x64xf32>, vector<64x256xf32>, vector<8x256xf32> -> vector<8x256xf32>
    %63 = arith.addf %61, %62 : vector<8x256xf32>
    %64 = vector.extract_strided_slice %63 {offsets = [0, 0], sizes = [8, 192], strides = [1, 1]} : vector<8x256xf32> to vector<8x192xf32>
    %65 = arith.negf %64 : vector<8x192xf32>
    %66 = math.exp %65 : vector<8x192xf32>
    %cst_25 = arith.constant 1.000000e+00 : f32
    %67 = vector.broadcast %cst_25 : f32 to vector<8x192xf32>
    %68 = arith.addf %67, %66 : vector<8x192xf32>
    %69 = arith.divf %67, %68 : vector<8x192xf32>
    %70 = vector.extract_strided_slice %63 {offsets = [0, 192], sizes = [8, 64], strides = [1, 1]} : vector<8x256xf32> to vector<8x64xf32>
    %71 = math.tanh %70 : vector<8x64xf32>
    %72 = vector.extract_strided_slice %69 {offsets = [0, 0], sizes = [8, 64], strides = [1, 1]} : vector<8x192xf32> to vector<8x64xf32>
    %73 = vector.extract_strided_slice %69 {offsets = [0, 64], sizes = [8, 64], strides = [1, 1]} : vector<8x192xf32> to vector<8x64xf32>
    %74 = vector.extract_strided_slice %69 {offsets = [0, 128], sizes = [8, 64], strides = [1, 1]} : vector<8x192xf32> to vector<8x64xf32>
    %75 = arith.mulf %73, %54 : vector<8x64xf32>
    %76 = arith.mulf %72, %71 : vector<8x64xf32>
    %77 = arith.addf %75, %76 : vector<8x64xf32>
    %78 = math.tanh %77 : vector<8x64xf32>
    %79 = arith.mulf %74, %78 : vector<8x64xf32>
    %c7_i32_26 = arith.constant 7 : i32
    %80 = arith.subi %c7_i32_26, %c1_i32 : i32
    %81 = vector.broadcast %c1_i32 : i32 to vector<8x64xi32>
    %82 = vector.broadcast %80 : i32 to vector<8x64xi32>
    %83 = arith.select %13, %81, %82 : vector<8x64xi1>, vector<8x64xi32>
    %84 = arith.cmpi slt, %83, %10 : vector<8x64xi32>
    %cst_27 = arith.constant 0.000000e+00 : f32
    %85 = vector.broadcast %cst_27 : f32 to vector<8x64xf32>
    %86 = arith.select %84, %79, %85 : vector<8x64xi1>, vector<8x64xf32>
    %87 = vector.extract_strided_slice %86 {offsets = [0, 0], sizes = [8, 32], strides = [1, 1]} : vector<8x64xf32> to vector<8x32xf32>
    %88 = arith.index_cast %56 : i32 to index
    %c0_28 = arith.constant 0 : index
    %89 = vector.load %arg13[%88, %c0_28] : memref<64x32xf32, #tpu.memory_space<vmem>>, vector<8x32xf32>
    tpu.vector_store %arg13[%88, %c0_28], %87 {strides = array<i32>} : memref<64x32xf32, #tpu.memory_space<vmem>>, vector<8x32xf32>,
    %90 = vector.extract_strided_slice %86 {offsets = [0, 32], sizes = [8, 32], strides = [1, 1]} : vector<8x64xf32> to vector<8x32xf32>
    %91 = arith.index_cast %59 : i32 to index
    %c0_29 = arith.constant 0 : index
    %92 = vector.load %arg14[%91, %c0_29] : memref<64x32xf32, #tpu.memory_space<vmem>>, vector<8x32xf32>
    tpu.vector_store %arg14[%91, %c0_29], %90 {strides = array<i32>} : memref<64x32xf32, #tpu.memory_space<vmem>>, vector<8x32xf32>,
    %93 = arith.select %84, %79, %53 : vector<8x64xi1>, vector<8x64xf32>
    %94 = arith.select %84, %77, %54 : vector<8x64xi1>, vector<8x64xf32>
    %c2_i32 = arith.constant 2 : i32
    %c8_i32_30 = arith.constant 8 : i32
    %95 = arith.muli %c2_i32, %c8_i32_30 : i32
    %96 = tpu.assume_multiple %95, 8 : i32
    %c7_i32_31 = arith.constant 7 : i32
    %97 = arith.subi %c7_i32_31, %c2_i32 : i32
    %c8_i32_32 = arith.constant 8 : i32
    %98 = arith.muli %97, %c8_i32_32 : i32
    %99 = tpu.assume_multiple %98, 8 : i32
    %100 = arith.index_cast %96 : i32 to index
    %c0_33 = arith.constant 0 : index
    %101 = vector.load %arg12[%100, %c0_33] : memref<64x256xf32, #tpu.memory_space<vmem>>, vector<8x256xf32>
    %cst_34 = arith.constant dense<0.000000e+00> : vector<8x256xf32>
    %102 = tpu.matmul %93, %7, %cst_34 {dimension_numbers = #tpu.dot_dimension_numbers<[1], [0], [0], [1], [0, 0, 1, 1], [], []>} : vector<8x64xf32>, vector<64x256xf32>, vector<8x256xf32> -> vector<8x256xf32>
    %103 = arith.addf %101, %102 : vector<8x256xf32>
    %104 = vector.extract_strided_slice %103 {offsets = [0, 0], sizes = [8, 192], strides = [1, 1]} : vector<8x256xf32> to vector<8x192xf32>
    %105 = arith.negf %104 : vector<8x192xf32>
    %106 = math.exp %105 : vector<8x192xf32>
    %cst_35 = arith.constant 1.000000e+00 : f32
    %107 = vector.broadcast %cst_35 : f32 to vector<8x192xf32>
    %108 = arith.addf %107, %106 : vector<8x192xf32>
    %109 = arith.divf %107, %108 : vector<8x192xf32>
    %110 = vector.extract_strided_slice %103 {offsets = [0, 192], sizes = [8, 64], strides = [1, 1]} : vector<8x256xf32> to vector<8x64xf32>
    %111 = math.tanh %110 : vector<8x64xf32>
    %112 = vector.extract_strided_slice %109 {offsets = [0, 0], sizes = [8, 64], strides = [1, 1]} : vector<8x192xf32> to vector<8x64xf32>
    %113 = vector.extract_strided_slice %109 {offsets = [0, 64], sizes = [8, 64], strides = [1, 1]} : vector<8x192xf32> to vector<8x64xf32>
    %114 = vector.extract_strided_slice %109 {offsets = [0, 128], sizes = [8, 64], strides = [1, 1]} : vector<8x192xf32> to vector<8x64xf32>
    %115 = arith.mulf %113, %94 : vector<8x64xf32>
    %116 = arith.mulf %112, %111 : vector<8x64xf32>
    %117 = arith.addf %115, %116 : vector<8x64xf32>
    %118 = math.tanh %117 : vector<8x64xf32>
    %119 = arith.mulf %114, %118 : vector<8x64xf32>
    %c7_i32_36 = arith.constant 7 : i32
    %120 = arith.subi %c7_i32_36, %c2_i32 : i32
    %121 = vector.broadcast %c2_i32 : i32 to vector<8x64xi32>
    %122 = vector.broadcast %120 : i32 to vector<8x64xi32>
    %123 = arith.select %13, %121, %122 : vector<8x64xi1>, vector<8x64xi32>
    %124 = arith.cmpi slt, %123, %10 : vector<8x64xi32>
    %cst_37 = arith.constant 0.000000e+00 : f32
    %125 = vector.broadcast %cst_37 : f32 to vector<8x64xf32>
    %126 = arith.select %124, %119, %125 : vector<8x64xi1>, vector<8x64xf32>
    %127 = vector.extract_strided_slice %126 {offsets = [0, 0], sizes = [8, 32], strides = [1, 1]} : vector<8x64xf32> to vector<8x32xf32>
    %128 = arith.index_cast %96 : i32 to index
    %c0_38 = arith.constant 0 : index
    %129 = vector.load %arg13[%128, %c0_38] : memref<64x32xf32, #tpu.memory_space<vmem>>, vector<8x32xf32>
    tpu.vector_store %arg13[%128, %c0_38], %127 {strides = array<i32>} : memref<64x32xf32, #tpu.memory_space<vmem>>, vector<8x32xf32>,
    %130 = vector.extract_strided_slice %126 {offsets = [0, 32], sizes = [8, 32], strides = [1, 1]} : vector<8x64xf32> to vector<8x32xf32>
    %131 = arith.index_cast %99 : i32 to index
    %c0_39 = arith.constant 0 : index
    %132 = vector.load %arg14[%131, %c0_39] : memref<64x32xf32, #tpu.memory_space<vmem>>, vector<8x32xf32>
    tpu.vector_store %arg14[%131, %c0_39], %130 {strides = array<i32>} : memref<64x32xf32, #tpu.memory_space<vmem>>, vector<8x32xf32>,
    %133 = arith.select %124, %119, %93 : vector<8x64xi1>, vector<8x64xf32>
    %134 = arith.select %124, %117, %94 : vector<8x64xi1>, vector<8x64xf32>
    %c3_i32 = arith.constant 3 : i32
    %c8_i32_40 = arith.constant 8 : i32
    %135 = arith.muli %c3_i32, %c8_i32_40 : i32
    %136 = tpu.assume_multiple %135, 8 : i32
    %c7_i32_41 = arith.constant 7 : i32
    %137 = arith.subi %c7_i32_41, %c3_i32 : i32
    %c8_i32_42 = arith.constant 8 : i32
    %138 = arith.muli %137, %c8_i32_42 : i32
    %139 = tpu.assume_multiple %138, 8 : i32
    %140 = arith.index_cast %136 : i32 to index
    %c0_43 = arith.constant 0 : index
    %141 = vector.load %arg12[%140, %c0_43] : memref<64x256xf32, #tpu.memory_space<vmem>>, vector<8x256xf32>
    %cst_44 = arith.constant dense<0.000000e+00> : vector<8x256xf32>
    %142 = tpu.matmul %133, %7, %cst_44 {dimension_numbers = #tpu.dot_dimension_numbers<[1], [0], [0], [1], [0, 0, 1, 1], [], []>} : vector<8x64xf32>, vector<64x256xf32>, vector<8x256xf32> -> vector<8x256xf32>
    %143 = arith.addf %141, %142 : vector<8x256xf32>
    %144 = vector.extract_strided_slice %143 {offsets = [0, 0], sizes = [8, 192], strides = [1, 1]} : vector<8x256xf32> to vector<8x192xf32>
    %145 = arith.negf %144 : vector<8x192xf32>
    %146 = math.exp %145 : vector<8x192xf32>
    %cst_45 = arith.constant 1.000000e+00 : f32
    %147 = vector.broadcast %cst_45 : f32 to vector<8x192xf32>
    %148 = arith.addf %147, %146 : vector<8x192xf32>
    %149 = arith.divf %147, %148 : vector<8x192xf32>
    %150 = vector.extract_strided_slice %143 {offsets = [0, 192], sizes = [8, 64], strides = [1, 1]} : vector<8x256xf32> to vector<8x64xf32>
    %151 = math.tanh %150 : vector<8x64xf32>
    %152 = vector.extract_strided_slice %149 {offsets = [0, 0], sizes = [8, 64], strides = [1, 1]} : vector<8x192xf32> to vector<8x64xf32>
    %153 = vector.extract_strided_slice %149 {offsets = [0, 64], sizes = [8, 64], strides = [1, 1]} : vector<8x192xf32> to vector<8x64xf32>
    %154 = vector.extract_strided_slice %149 {offsets = [0, 128], sizes = [8, 64], strides = [1, 1]} : vector<8x192xf32> to vector<8x64xf32>
    %155 = arith.mulf %153, %134 : vector<8x64xf32>
    %156 = arith.mulf %152, %151 : vector<8x64xf32>
    %157 = arith.addf %155, %156 : vector<8x64xf32>
    %158 = math.tanh %157 : vector<8x64xf32>
    %159 = arith.mulf %154, %158 : vector<8x64xf32>
    %c7_i32_46 = arith.constant 7 : i32
    %160 = arith.subi %c7_i32_46, %c3_i32 : i32
    %161 = vector.broadcast %c3_i32 : i32 to vector<8x64xi32>
    %162 = vector.broadcast %160 : i32 to vector<8x64xi32>
    %163 = arith.select %13, %161, %162 : vector<8x64xi1>, vector<8x64xi32>
    %164 = arith.cmpi slt, %163, %10 : vector<8x64xi32>
    %cst_47 = arith.constant 0.000000e+00 : f32
    %165 = vector.broadcast %cst_47 : f32 to vector<8x64xf32>
    %166 = arith.select %164, %159, %165 : vector<8x64xi1>, vector<8x64xf32>
    %167 = vector.extract_strided_slice %166 {offsets = [0, 0], sizes = [8, 32], strides = [1, 1]} : vector<8x64xf32> to vector<8x32xf32>
    %168 = arith.index_cast %136 : i32 to index
    %c0_48 = arith.constant 0 : index
    %169 = vector.load %arg13[%168, %c0_48] : memref<64x32xf32, #tpu.memory_space<vmem>>, vector<8x32xf32>
    tpu.vector_store %arg13[%168, %c0_48], %167 {strides = array<i32>} : memref<64x32xf32, #tpu.memory_space<vmem>>, vector<8x32xf32>,
    %170 = vector.extract_strided_slice %166 {offsets = [0, 32], sizes = [8, 32], strides = [1, 1]} : vector<8x64xf32> to vector<8x32xf32>
    %171 = arith.index_cast %139 : i32 to index
    %c0_49 = arith.constant 0 : index
    %172 = vector.load %arg14[%171, %c0_49] : memref<64x32xf32, #tpu.memory_space<vmem>>, vector<8x32xf32>
    tpu.vector_store %arg14[%171, %c0_49], %170 {strides = array<i32>} : memref<64x32xf32, #tpu.memory_space<vmem>>, vector<8x32xf32>,
    %173 = arith.select %164, %159, %133 : vector<8x64xi1>, vector<8x64xf32>
    %174 = arith.select %164, %157, %134 : vector<8x64xi1>, vector<8x64xf32>
    %c4_i32 = arith.constant 4 : i32
    %c8_i32_50 = arith.constant 8 : i32
    %175 = arith.muli %c4_i32, %c8_i32_50 : i32
    %176 = tpu.assume_multiple %175, 8 : i32
    %c7_i32_51 = arith.constant 7 : i32
    %177 = arith.subi %c7_i32_51, %c4_i32 : i32
    %c8_i32_52 = arith.constant 8 : i32
    %178 = arith.muli %177, %c8_i32_52 : i32
    %179 = tpu.assume_multiple %178, 8 : i32
    %180 = arith.index_cast %176 : i32 to index
    %c0_53 = arith.constant 0 : index
    %181 = vector.load %arg12[%180, %c0_53] : memref<64x256xf32, #tpu.memory_space<vmem>>, vector<8x256xf32>
    %cst_54 = arith.constant dense<0.000000e+00> : vector<8x256xf32>
    %182 = tpu.matmul %173, %7, %cst_54 {dimension_numbers = #tpu.dot_dimension_numbers<[1], [0], [0], [1], [0, 0, 1, 1], [], []>} : vector<8x64xf32>, vector<64x256xf32>, vector<8x256xf32> -> vector<8x256xf32>
    %183 = arith.addf %181, %182 : vector<8x256xf32>
    %184 = vector.extract_strided_slice %183 {offsets = [0, 0], sizes = [8, 192], strides = [1, 1]} : vector<8x256xf32> to vector<8x192xf32>
    %185 = arith.negf %184 : vector<8x192xf32>
    %186 = math.exp %185 : vector<8x192xf32>
    %cst_55 = arith.constant 1.000000e+00 : f32
    %187 = vector.broadcast %cst_55 : f32 to vector<8x192xf32>
    %188 = arith.addf %187, %186 : vector<8x192xf32>
    %189 = arith.divf %187, %188 : vector<8x192xf32>
    %190 = vector.extract_strided_slice %183 {offsets = [0, 192], sizes = [8, 64], strides = [1, 1]} : vector<8x256xf32> to vector<8x64xf32>
    %191 = math.tanh %190 : vector<8x64xf32>
    %192 = vector.extract_strided_slice %189 {offsets = [0, 0], sizes = [8, 64], strides = [1, 1]} : vector<8x192xf32> to vector<8x64xf32>
    %193 = vector.extract_strided_slice %189 {offsets = [0, 64], sizes = [8, 64], strides = [1, 1]} : vector<8x192xf32> to vector<8x64xf32>
    %194 = vector.extract_strided_slice %189 {offsets = [0, 128], sizes = [8, 64], strides = [1, 1]} : vector<8x192xf32> to vector<8x64xf32>
    %195 = arith.mulf %193, %174 : vector<8x64xf32>
    %196 = arith.mulf %192, %191 : vector<8x64xf32>
    %197 = arith.addf %195, %196 : vector<8x64xf32>
    %198 = math.tanh %197 : vector<8x64xf32>
    %199 = arith.mulf %194, %198 : vector<8x64xf32>
    %c7_i32_56 = arith.constant 7 : i32
    %200 = arith.subi %c7_i32_56, %c4_i32 : i32
    %201 = vector.broadcast %c4_i32 : i32 to vector<8x64xi32>
    %202 = vector.broadcast %200 : i32 to vector<8x64xi32>
    %203 = arith.select %13, %201, %202 : vector<8x64xi1>, vector<8x64xi32>
    %204 = arith.cmpi slt, %203, %10 : vector<8x64xi32>
    %cst_57 = arith.constant 0.000000e+00 : f32
    %205 = vector.broadcast %cst_57 : f32 to vector<8x64xf32>
    %206 = arith.select %204, %199, %205 : vector<8x64xi1>, vector<8x64xf32>
    %207 = vector.extract_strided_slice %206 {offsets = [0, 0], sizes = [8, 32], strides = [1, 1]} : vector<8x64xf32> to vector<8x32xf32>
    %208 = arith.index_cast %176 : i32 to index
    %c0_58 = arith.constant 0 : index
    %209 = vector.load %arg13[%208, %c0_58] : memref<64x32xf32, #tpu.memory_space<vmem>>, vector<8x32xf32>
    tpu.vector_store %arg13[%208, %c0_58], %207 {strides = array<i32>} : memref<64x32xf32, #tpu.memory_space<vmem>>, vector<8x32xf32>,
    %210 = vector.extract_strided_slice %206 {offsets = [0, 32], sizes = [8, 32], strides = [1, 1]} : vector<8x64xf32> to vector<8x32xf32>
    %211 = arith.index_cast %179 : i32 to index
    %c0_59 = arith.constant 0 : index
    %212 = vector.load %arg14[%211, %c0_59] : memref<64x32xf32, #tpu.memory_space<vmem>>, vector<8x32xf32>
    tpu.vector_store %arg14[%211, %c0_59], %210 {strides = array<i32>} : memref<64x32xf32, #tpu.memory_space<vmem>>, vector<8x32xf32>,
    %213 = arith.select %204, %199, %173 : vector<8x64xi1>, vector<8x64xf32>
    %214 = arith.select %204, %197, %174 : vector<8x64xi1>, vector<8x64xf32>
    %c5_i32 = arith.constant 5 : i32
    %c8_i32_60 = arith.constant 8 : i32
    %215 = arith.muli %c5_i32, %c8_i32_60 : i32
    %216 = tpu.assume_multiple %215, 8 : i32
    %c7_i32_61 = arith.constant 7 : i32
    %217 = arith.subi %c7_i32_61, %c5_i32 : i32
    %c8_i32_62 = arith.constant 8 : i32
    %218 = arith.muli %217, %c8_i32_62 : i32
    %219 = tpu.assume_multiple %218, 8 : i32
    %220 = arith.index_cast %216 : i32 to index
    %c0_63 = arith.constant 0 : index
    %221 = vector.load %arg12[%220, %c0_63] : memref<64x256xf32, #tpu.memory_space<vmem>>, vector<8x256xf32>
    %cst_64 = arith.constant dense<0.000000e+00> : vector<8x256xf32>
    %222 = tpu.matmul %213, %7, %cst_64 {dimension_numbers = #tpu.dot_dimension_numbers<[1], [0], [0], [1], [0, 0, 1, 1], [], []>} : vector<8x64xf32>, vector<64x256xf32>, vector<8x256xf32> -> vector<8x256xf32>
    %223 = arith.addf %221, %222 : vector<8x256xf32>
    %224 = vector.extract_strided_slice %223 {offsets = [0, 0], sizes = [8, 192], strides = [1, 1]} : vector<8x256xf32> to vector<8x192xf32>
    %225 = arith.negf %224 : vector<8x192xf32>
    %226 = math.exp %225 : vector<8x192xf32>
    %cst_65 = arith.constant 1.000000e+00 : f32
    %227 = vector.broadcast %cst_65 : f32 to vector<8x192xf32>
    %228 = arith.addf %227, %226 : vector<8x192xf32>
    %229 = arith.divf %227, %228 : vector<8x192xf32>
    %230 = vector.extract_strided_slice %223 {offsets = [0, 192], sizes = [8, 64], strides = [1, 1]} : vector<8x256xf32> to vector<8x64xf32>
    %231 = math.tanh %230 : vector<8x64xf32>
    %232 = vector.extract_strided_slice %229 {offsets = [0, 0], sizes = [8, 64], strides = [1, 1]} : vector<8x192xf32> to vector<8x64xf32>
    %233 = vector.extract_strided_slice %229 {offsets = [0, 64], sizes = [8, 64], strides = [1, 1]} : vector<8x192xf32> to vector<8x64xf32>
    %234 = vector.extract_strided_slice %229 {offsets = [0, 128], sizes = [8, 64], strides = [1, 1]} : vector<8x192xf32> to vector<8x64xf32>
    %235 = arith.mulf %233, %214 : vector<8x64xf32>
    %236 = arith.mulf %232, %231 : vector<8x64xf32>
    %237 = arith.addf %235, %236 : vector<8x64xf32>
    %238 = math.tanh %237 : vector<8x64xf32>
    %239 = arith.mulf %234, %238 : vector<8x64xf32>
    %c7_i32_66 = arith.constant 7 : i32
    %240 = arith.subi %c7_i32_66, %c5_i32 : i32
    %241 = vector.broadcast %c5_i32 : i32 to vector<8x64xi32>
    %242 = vector.broadcast %240 : i32 to vector<8x64xi32>
    %243 = arith.select %13, %241, %242 : vector<8x64xi1>, vector<8x64xi32>
    %244 = arith.cmpi slt, %243, %10 : vector<8x64xi32>
    %cst_67 = arith.constant 0.000000e+00 : f32
    %245 = vector.broadcast %cst_67 : f32 to vector<8x64xf32>
    %246 = arith.select %244, %239, %245 : vector<8x64xi1>, vector<8x64xf32>
    %247 = vector.extract_strided_slice %246 {offsets = [0, 0], sizes = [8, 32], strides = [1, 1]} : vector<8x64xf32> to vector<8x32xf32>
    %248 = arith.index_cast %216 : i32 to index
    %c0_68 = arith.constant 0 : index
    %249 = vector.load %arg13[%248, %c0_68] : memref<64x32xf32, #tpu.memory_space<vmem>>, vector<8x32xf32>
    tpu.vector_store %arg13[%248, %c0_68], %247 {strides = array<i32>} : memref<64x32xf32, #tpu.memory_space<vmem>>, vector<8x32xf32>,
    %250 = vector.extract_strided_slice %246 {offsets = [0, 32], sizes = [8, 32], strides = [1, 1]} : vector<8x64xf32> to vector<8x32xf32>
    %251 = arith.index_cast %219 : i32 to index
    %c0_69 = arith.constant 0 : index
    %252 = vector.load %arg14[%251, %c0_69] : memref<64x32xf32, #tpu.memory_space<vmem>>, vector<8x32xf32>
    tpu.vector_store %arg14[%251, %c0_69], %250 {strides = array<i32>} : memref<64x32xf32, #tpu.memory_space<vmem>>, vector<8x32xf32>,
    %253 = arith.select %244, %239, %213 : vector<8x64xi1>, vector<8x64xf32>
    %254 = arith.select %244, %237, %214 : vector<8x64xi1>, vector<8x64xf32>
    %c6_i32 = arith.constant 6 : i32
    %c8_i32_70 = arith.constant 8 : i32
    %255 = arith.muli %c6_i32, %c8_i32_70 : i32
    %256 = tpu.assume_multiple %255, 8 : i32
    %c7_i32_71 = arith.constant 7 : i32
    %257 = arith.subi %c7_i32_71, %c6_i32 : i32
    %c8_i32_72 = arith.constant 8 : i32
    %258 = arith.muli %257, %c8_i32_72 : i32
    %259 = tpu.assume_multiple %258, 8 : i32
    %260 = arith.index_cast %256 : i32 to index
    %c0_73 = arith.constant 0 : index
    %261 = vector.load %arg12[%260, %c0_73] : memref<64x256xf32, #tpu.memory_space<vmem>>, vector<8x256xf32>
    %cst_74 = arith.constant dense<0.000000e+00> : vector<8x256xf32>
    %262 = tpu.matmul %253, %7, %cst_74 {dimension_numbers = #tpu.dot_dimension_numbers<[1], [0], [0], [1], [0, 0, 1, 1], [], []>} : vector<8x64xf32>, vector<64x256xf32>, vector<8x256xf32> -> vector<8x256xf32>
    %263 = arith.addf %261, %262 : vector<8x256xf32>
    %264 = vector.extract_strided_slice %263 {offsets = [0, 0], sizes = [8, 192], strides = [1, 1]} : vector<8x256xf32> to vector<8x192xf32>
    %265 = arith.negf %264 : vector<8x192xf32>
    %266 = math.exp %265 : vector<8x192xf32>
    %cst_75 = arith.constant 1.000000e+00 : f32
    %267 = vector.broadcast %cst_75 : f32 to vector<8x192xf32>
    %268 = arith.addf %267, %266 : vector<8x192xf32>
    %269 = arith.divf %267, %268 : vector<8x192xf32>
    %270 = vector.extract_strided_slice %263 {offsets = [0, 192], sizes = [8, 64], strides = [1, 1]} : vector<8x256xf32> to vector<8x64xf32>
    %271 = math.tanh %270 : vector<8x64xf32>
    %272 = vector.extract_strided_slice %269 {offsets = [0, 0], sizes = [8, 64], strides = [1, 1]} : vector<8x192xf32> to vector<8x64xf32>
    %273 = vector.extract_strided_slice %269 {offsets = [0, 64], sizes = [8, 64], strides = [1, 1]} : vector<8x192xf32> to vector<8x64xf32>
    %274 = vector.extract_strided_slice %269 {offsets = [0, 128], sizes = [8, 64], strides = [1, 1]} : vector<8x192xf32> to vector<8x64xf32>
    %275 = arith.mulf %273, %254 : vector<8x64xf32>
    %276 = arith.mulf %272, %271 : vector<8x64xf32>
    %277 = arith.addf %275, %276 : vector<8x64xf32>
    %278 = math.tanh %277 : vector<8x64xf32>
    %279 = arith.mulf %274, %278 : vector<8x64xf32>
    %c7_i32_76 = arith.constant 7 : i32
    %280 = arith.subi %c7_i32_76, %c6_i32 : i32
    %281 = vector.broadcast %c6_i32 : i32 to vector<8x64xi32>
    %282 = vector.broadcast %280 : i32 to vector<8x64xi32>
    %283 = arith.select %13, %281, %282 : vector<8x64xi1>, vector<8x64xi32>
    %284 = arith.cmpi slt, %283, %10 : vector<8x64xi32>
    %cst_77 = arith.constant 0.000000e+00 : f32
    %285 = vector.broadcast %cst_77 : f32 to vector<8x64xf32>
    %286 = arith.select %284, %279, %285 : vector<8x64xi1>, vector<8x64xf32>
    %287 = vector.extract_strided_slice %286 {offsets = [0, 0], sizes = [8, 32], strides = [1, 1]} : vector<8x64xf32> to vector<8x32xf32>
    %288 = arith.index_cast %256 : i32 to index
    %c0_78 = arith.constant 0 : index
    %289 = vector.load %arg13[%288, %c0_78] : memref<64x32xf32, #tpu.memory_space<vmem>>, vector<8x32xf32>
    tpu.vector_store %arg13[%288, %c0_78], %287 {strides = array<i32>} : memref<64x32xf32, #tpu.memory_space<vmem>>, vector<8x32xf32>,
    %290 = vector.extract_strided_slice %286 {offsets = [0, 32], sizes = [8, 32], strides = [1, 1]} : vector<8x64xf32> to vector<8x32xf32>
    %291 = arith.index_cast %259 : i32 to index
    %c0_79 = arith.constant 0 : index
    %292 = vector.load %arg14[%291, %c0_79] : memref<64x32xf32, #tpu.memory_space<vmem>>, vector<8x32xf32>
    tpu.vector_store %arg14[%291, %c0_79], %290 {strides = array<i32>} : memref<64x32xf32, #tpu.memory_space<vmem>>, vector<8x32xf32>,
    %293 = arith.select %284, %279, %253 : vector<8x64xi1>, vector<8x64xf32>
    %294 = arith.select %284, %277, %254 : vector<8x64xi1>, vector<8x64xf32>
    %c7_i32_80 = arith.constant 7 : i32
    %c8_i32_81 = arith.constant 8 : i32
    %295 = arith.muli %c7_i32_80, %c8_i32_81 : i32
    %296 = tpu.assume_multiple %295, 8 : i32
    %c7_i32_82 = arith.constant 7 : i32
    %297 = arith.subi %c7_i32_82, %c7_i32_80 : i32
    %c8_i32_83 = arith.constant 8 : i32
    %298 = arith.muli %297, %c8_i32_83 : i32
    %299 = tpu.assume_multiple %298, 8 : i32
    %300 = arith.index_cast %296 : i32 to index
    %c0_84 = arith.constant 0 : index
    %301 = vector.load %arg12[%300, %c0_84] : memref<64x256xf32, #tpu.memory_space<vmem>>, vector<8x256xf32>
    %cst_85 = arith.constant dense<0.000000e+00> : vector<8x256xf32>
    %302 = tpu.matmul %293, %7, %cst_85 {dimension_numbers = #tpu.dot_dimension_numbers<[1], [0], [0], [1], [0, 0, 1, 1], [], []>} : vector<8x64xf32>, vector<64x256xf32>, vector<8x256xf32> -> vector<8x256xf32>
    %303 = arith.addf %301, %302 : vector<8x256xf32>
    %304 = vector.extract_strided_slice %303 {offsets = [0, 0], sizes = [8, 192], strides = [1, 1]} : vector<8x256xf32> to vector<8x192xf32>
    %305 = arith.negf %304 : vector<8x192xf32>
    %306 = math.exp %305 : vector<8x192xf32>
    %cst_86 = arith.constant 1.000000e+00 : f32
    %307 = vector.broadcast %cst_86 : f32 to vector<8x192xf32>
    %308 = arith.addf %307, %306 : vector<8x192xf32>
    %309 = arith.divf %307, %308 : vector<8x192xf32>
    %310 = vector.extract_strided_slice %303 {offsets = [0, 192], sizes = [8, 64], strides = [1, 1]} : vector<8x256xf32> to vector<8x64xf32>
    %311 = math.tanh %310 : vector<8x64xf32>
    %312 = vector.extract_strided_slice %309 {offsets = [0, 0], sizes = [8, 64], strides = [1, 1]} : vector<8x192xf32> to vector<8x64xf32>
    %313 = vector.extract_strided_slice %309 {offsets = [0, 64], sizes = [8, 64], strides = [1, 1]} : vector<8x192xf32> to vector<8x64xf32>
    %314 = vector.extract_strided_slice %309 {offsets = [0, 128], sizes = [8, 64], strides = [1, 1]} : vector<8x192xf32> to vector<8x64xf32>
    %315 = arith.mulf %313, %294 : vector<8x64xf32>
    %316 = arith.mulf %312, %311 : vector<8x64xf32>
    %317 = arith.addf %315, %316 : vector<8x64xf32>
    %318 = math.tanh %317 : vector<8x64xf32>
    %319 = arith.mulf %314, %318 : vector<8x64xf32>
    %c7_i32_87 = arith.constant 7 : i32
    %320 = arith.subi %c7_i32_87, %c7_i32_80 : i32
    %321 = vector.broadcast %c7_i32_80 : i32 to vector<8x64xi32>
    %322 = vector.broadcast %320 : i32 to vector<8x64xi32>
    %323 = arith.select %13, %321, %322 : vector<8x64xi1>, vector<8x64xi32>
    %324 = arith.cmpi slt, %323, %10 : vector<8x64xi32>
    %cst_88 = arith.constant 0.000000e+00 : f32
    %325 = vector.broadcast %cst_88 : f32 to vector<8x64xf32>
    %326 = arith.select %324, %319, %325 : vector<8x64xi1>, vector<8x64xf32>
    %327 = vector.extract_strided_slice %326 {offsets = [0, 0], sizes = [8, 32], strides = [1, 1]} : vector<8x64xf32> to vector<8x32xf32>
    %328 = arith.index_cast %296 : i32 to index
    %c0_89 = arith.constant 0 : index
    %329 = vector.load %arg13[%328, %c0_89] : memref<64x32xf32, #tpu.memory_space<vmem>>, vector<8x32xf32>
    tpu.vector_store %arg13[%328, %c0_89], %327 {strides = array<i32>} : memref<64x32xf32, #tpu.memory_space<vmem>>, vector<8x32xf32>,
    %330 = vector.extract_strided_slice %326 {offsets = [0, 32], sizes = [8, 32], strides = [1, 1]} : vector<8x64xf32> to vector<8x32xf32>
    %331 = arith.index_cast %299 : i32 to index
    %c0_90 = arith.constant 0 : index
    %332 = vector.load %arg14[%331, %c0_90] : memref<64x32xf32, #tpu.memory_space<vmem>>, vector<8x32xf32>
    tpu.vector_store %arg14[%331, %c0_90], %330 {strides = array<i32>} : memref<64x32xf32, #tpu.memory_space<vmem>>, vector<8x32xf32>,
    %333 = arith.select %324, %319, %293 : vector<8x64xi1>, vector<8x64xf32>
    %334 = arith.select %324, %317, %294 : vector<8x64xi1>, vector<8x64xf32>
    %c8_i32_91 = arith.constant 8 : i32
    %c0_92 = arith.constant 0 : index
    %c0_93 = arith.constant 0 : index
    %335 = vector.load %arg13[%c0_92, %c0_93] : memref<64x32xf32, #tpu.memory_space<vmem>>, vector<64x32xf32>
    %c0_94 = arith.constant 0 : index
    %c0_95 = arith.constant 0 : index
    %336 = vector.load %arg5[%c0_94, %c0_95] : memref<32x128xf32, #tpu.memory_space<vmem>>, vector<32x128xf32>
    %cst_96 = arith.constant dense<0.000000e+00> : vector<64x128xf32>
    %337 = tpu.matmul %335, %336, %cst_96 {dimension_numbers = #tpu.dot_dimension_numbers<[1], [0], [0], [1], [0, 0, 1, 1], [], []>} : vector<64x32xf32>, vector<32x128xf32>, vector<64x128xf32> -> vector<64x128xf32>
    %c0_97 = arith.constant 0 : index
    %c0_98 = arith.constant 0 : index
    %338 = vector.load %arg14[%c0_97, %c0_98] : memref<64x32xf32, #tpu.memory_space<vmem>>, vector<64x32xf32>
    %c0_99 = arith.constant 0 : index
    %c0_100 = arith.constant 0 : index
    %339 = vector.load %arg6[%c0_99, %c0_100] : memref<32x128xf32, #tpu.memory_space<vmem>>, vector<32x128xf32>
    %cst_101 = arith.constant dense<0.000000e+00> : vector<64x128xf32>
    %340 = tpu.matmul %338, %339, %cst_101 {dimension_numbers = #tpu.dot_dimension_numbers<[1], [0], [0], [1], [0, 0, 1, 1], [], []>} : vector<64x32xf32>, vector<32x128xf32>, vector<64x128xf32> -> vector<64x128xf32>
    %341 = arith.addf %337, %340 : vector<64x128xf32>
    %c0_102 = arith.constant 0 : index
    %c0_103 = arith.constant 0 : index
    %342 = vector.load %arg7[%c0_102, %c0_103] : memref<1x128xf32, #tpu.memory_space<vmem>>, vector<1x128xf32>
    %343 = vector.broadcast %342 : vector<1x128xf32> to vector<64x128xf32>
    %344 = arith.addf %341, %343 : vector<64x128xf32>
    %c0_104 = arith.constant 0 : index
    %c0_105 = arith.constant 0 : index
    %345 = vector.load %arg10[%c0_104, %c0_105] : memref<64x128xf32, #tpu.memory_space<vmem>>, vector<64x128xf32>
    tpu.vector_store %arg10[%c0_104, %c0_105], %344 {strides = array<i32>} : memref<64x128xf32, #tpu.memory_space<vmem>>, vector<64x128xf32>,
    %c0_106 = arith.constant 0 : index
    %c0_107 = arith.constant 0 : index
    %346 = vector.load %arg8[%c0_106, %c0_107] : memref<64x128xf32, #tpu.memory_space<vmem>>, vector<64x128xf32>
    %cst_108 = arith.constant dense<0.000000e+00> : vector<8x128xf32>
    %347 = tpu.matmul %333, %346, %cst_108 {dimension_numbers = #tpu.dot_dimension_numbers<[1], [0], [0], [1], [0, 0, 1, 1], [], []>} : vector<8x64xf32>, vector<64x128xf32>, vector<8x128xf32> -> vector<8x128xf32>
    %c0_109 = arith.constant 0 : index
    %c0_110 = arith.constant 0 : index
    %348 = vector.load %arg9[%c0_109, %c0_110] : memref<1x128xf32, #tpu.memory_space<vmem>>, vector<1x128xf32>
    %349 = vector.broadcast %348 : vector<1x128xf32> to vector<8x128xf32>
    %350 = arith.addf %347, %349 : vector<8x128xf32>
    %c0_111 = arith.constant 0 : index
    %c0_112 = arith.constant 0 : index
    %351 = vector.load %arg11[%c0_111, %c0_112] : memref<8x128xf32, #tpu.memory_space<vmem>>, vector<8x128xf32>
    tpu.vector_store %arg11[%c0_111, %c0_112], %350 {strides = array<i32>} : memref<8x128xf32, #tpu.memory_space<vmem>>, vector<8x128xf32>,
    return
  }
}

</mosaic_0001>

<llo_original>
// kernel: tpu_custom_call.1
$region0: #{tpu_custom_call.1}
  #allocation0 [shape = 'u32[]', space=smem, size = 0x4, offset = 0x4, fixed_abs, tag = 'smem constant byte address 0x4 - core index']
  #allocation1 [shape = 'u32[144,128]{1,0:T(1,128)}', space=vmem, size = 0x12000, scoped, tag = 'internal scratch']
  #allocation2 [shape = 'f32[64,256]{1,0:T(8,128)}', space=vmem, size = 0x10000, scoped, tag = 'scratch operand']
  #allocation3 [shape = 'f32[64,32]{1,0:T(8,128)}', space=vmem, size = 0x8000, scoped, tag = 'scratch operand']
  #allocation4 [shape = 'f32[64,32]{1,0:T(8,128)}', space=vmem, size = 0x8000, scoped, tag = 'scratch operand']
  %s0 = inlined_call_operand.vmem [shape: f32[64,32], index: 0, kind: input, shape index: {}]
  %s1 = inlined_call_operand.vmem [shape: s32[8,1], index: 1, kind: input, shape index: {}]
  %s2 = inlined_call_operand.vmem [shape: f32[32,256], index: 2, kind: input, shape index: {}]
  %s3 = inlined_call_operand.vmem [shape: f32[1,256], index: 3, kind: input, shape index: {}]
  %s4 = inlined_call_operand.hbm [shape: f32[64,256], index: 4, kind: input, shape index: {}]
  %s5 = inlined_call_operand.hbm [shape: f32[32,128], index: 5, kind: input, shape index: {}]
  %s6 = inlined_call_operand.hbm [shape: f32[32,128], index: 6, kind: input, shape index: {}]
  %s7 = inlined_call_operand.vmem [shape: f32[1,128], index: 7, kind: input, shape index: {}]
  %s8 = inlined_call_operand.vmem [shape: f32[64,128], index: 8, kind: input, shape index: {}]
  %s9 = inlined_call_operand.vmem [shape: f32[1,128], index: 9, kind: input, shape index: {}]
  %s10 = inlined_call_operand.hbm [shape: f32[64,128], index: 10, kind: output, shape index: {0}]
  %s11 = inlined_call_operand.hbm [shape: f32[8,128], index: 11, kind: output, shape index: {1}]
  %12 = xla_tuple %s10, %s11
  %s13 = sld [smem:[#allocation0]]
  $region70: #{tpu_custom_call.1} parent=0
    _
  %s15 = ssub.s32 1, %s13
  %s16 = scalar_select 0, %s15, %s13
  $region1: #{tpu_custom_call.1} parent=0
    #allocation5 [shape = 'u8[65536]{0}', space=vmem, size = 0x10000, scoped, tag = 'input window, operand 4, single buffered']
    #allocation6 [shape = 's32[1]{0}', space=sflag, size = 0x4, scoped, tag = 'scoped memory for tpu_custom_call.1']
    #allocation7 [shape = 's32[1]{0}', space=sflag, size = 0x4, scoped, tag = 'scoped memory for tpu_custom_call.1']
    #allocation8 [shape = 'u8[16384]{0}', space=vmem, size = 0x4000, scoped, tag = 'input window, operand 5, single buffered']
    #allocation9 [shape = 's32[1]{0}', space=sflag, size = 0x4, scoped, tag = 'scoped memory for tpu_custom_call.1']
    #allocation10 [shape = 'u8[16384]{0}', space=vmem, size = 0x4000, scoped, tag = 'input window, operand 6, single buffered']
    #allocation11 [shape = 'u8[32768]{0}', space=vmem, size = 0x8000, scoped, tag = 'output window, operand 0, single buffered']
    #allocation12 [shape = 'u8[4096]{0}', space=vmem, size = 0x1000, scoped, tag = 'output window, operand 1, single buffered']
    #allocation13 [shape = 's32[1]{0}', space=sflag, size = 0x4, scoped, tag = 'scoped memory for tpu_custom_call.1']
    %17 = vsyncpa [#allocation6], 0
    %18 = vsyncpa [#allocation9], 0
    %19 = vsyncpa [#allocation7], 0
    %20 = vsyncpa [#allocation13], 0
    // Predicated region
    $region2: #{tpu_custom_call.1} parent=1 // pred_check
      _
    $region3: #{tpu_custom_call.1} parent=1 // pred_check_branch
      %22 = sbr.rel (0) target = $region5
    $region4: #{tpu_custom_call.1} parent=1 // pred_region
      _
    $region5: #{tpu_custom_call.1} parent=1 // pred_fallthru
      _
    // Predicated region
    $region6: #{tpu_custom_call.1} parent=1 // pred_check
      _
    $region7: #{tpu_custom_call.1} parent=1 // pred_check_branch
      %24 = sbr.rel (0) target = $region9
    $region8: #{tpu_custom_call.1} parent=1 // pred_region
      _
    $region9: #{tpu_custom_call.1} parent=1 // pred_fallthru
      _
    // Predicated region
    $region10: #{tpu_custom_call.1} parent=1 // pred_check
      _
    $region11: #{tpu_custom_call.1} parent=1 // pred_check_branch
      %26 = sbr.rel (0) target = $region13
    $region12: #{tpu_custom_call.1} parent=1 // pred_region
      _
    $region13: #{tpu_custom_call.1} parent=1 // pred_fallthru
      _
    // Predicated region
    $region14: #{tpu_custom_call.1} parent=1 // pred_check
      _
    $region15: #{tpu_custom_call.1} parent=1 // pred_check_branch
      %28 = sbr.rel (0) target = $region17
    $region16: #{tpu_custom_call.1} parent=1 // pred_region
      _
    $region17: #{tpu_custom_call.1} parent=1 // pred_fallthru
      _
    // Predicated region
    $region18: #{tpu_custom_call.1} parent=1 // pred_check
      _
    $region19: #{tpu_custom_call.1} parent=1 // pred_check_branch
      %30 = sbr.rel (0) target = $region21
    $region20: #{tpu_custom_call.1} parent=1 // pred_region
      %s32 = ssub.s32 2048, 2048
      %33 = vsyncadd [#allocation6], %s32
      %s34 = sshll.u32 [#allocation5], 4
      %s35 = int_to_ptr.vmem [resolvable:$true] %s34
      %40 = dma.hbm_to_vmem [thread:$0]  %s4, 2048, %s35, [#allocation6], 256, 256, 16
    $region21: #{tpu_custom_call.1} parent=1 // pred_fallthru
      _
    // Predicated region
    $region22: #{tpu_custom_call.1} parent=1 // pred_check
      _
    $region23: #{tpu_custom_call.1} parent=1 // pred_check_branch
      %42 = sbr.rel (0) target = $region25
    $region24: #{tpu_custom_call.1} parent=1 // pred_region
      %s44 = ssub.s32 512, 512
      %45 = vsyncadd [#allocation9], %s44
      %s46 = sshll.u32 [#allocation8], 4
      %s47 = int_to_ptr.vmem [resolvable:$true] %s46
      %52 = dma.hbm_to_vmem [thread:$0]  %s5, 512, %s47, [#allocation9], 128, 128, 8
    $region25: #{tpu_custom_call.1} parent=1 // pred_fallthru
      _
    // Predicated region
    $region26: #{tpu_custom_call.1} parent=1 // pred_check
      _
    $region27: #{tpu_custom_call.1} parent=1 // pred_check_branch
      %54 = sbr.rel (0) target = $region29
    $region28: #{tpu_custom_call.1} parent=1 // pred_region
      %s56 = ssub.s32 512, 512
      %57 = vsyncadd [#allocation9], %s56
      %s58 = sshll.u32 [#allocation10], 4
      %s59 = int_to_ptr.vmem [resolvable:$true] %s58
      %64 = dma.hbm_to_vmem [thread:$0]  %s6, 512, %s59, [#allocation9], 128, 128, 8
    $region29: #{tpu_custom_call.1} parent=1 // pred_fallthru
      _
    // Predicated region
    $region30: #{tpu_custom_call.1} parent=1 // pred_check
      _
    $region31: #{tpu_custom_call.1} parent=1 // pred_check_branch
      %66 = sbr.rel (0) target = $region33
    $region32: #{tpu_custom_call.1} parent=1 // pred_region
      _
    $region33: #{tpu_custom_call.1} parent=1 // pred_fallthru
      _
    // Predicated region
    $region34: #{tpu_custom_call.1} parent=1 // pred_check
      _
    $region35: #{tpu_custom_call.1} parent=1 // pred_check_branch
      %68 = sbr.rel (0) target = $region37
    $region36: #{tpu_custom_call.1} parent=1 // pred_region
      _
    $region37: #{tpu_custom_call.1} parent=1 // pred_fallthru
      _
    // Predicated region
    $region38: #{tpu_custom_call.1} parent=1 // pred_check
      _
    $region39: #{tpu_custom_call.1} parent=1 // pred_check_branch
      %70 = sbr.rel (0) target = $region41
    $region40: #{tpu_custom_call.1} parent=1 // pred_region
      _
    $region41: #{tpu_custom_call.1} parent=1 // pred_fallthru
      _
    // Predicated region
    $region42: #{tpu_custom_call.1} parent=1 // pred_check
      _
    $region43: #{tpu_custom_call.1} parent=1 // pred_check_branch
      %72 = sbr.rel (0) target = $region45
    $region44: #{tpu_custom_call.1} parent=1 // pred_region
      %73 = dma.done [#allocation6], 2048
    $region45: #{tpu_custom_call.1} parent=1 // pred_fallthru
      _
    // Predicated region
    $region46: #{tpu_custom_call.1} parent=1 // pred_check
      _
    $region47: #{tpu_custom_call.1} parent=1 // pred_check_branch
      %75 = sbr.rel (0) target = $region49
    $region48: #{tpu_custom_call.1} parent=1 // pred_region
      %76 = dma.done [#allocation9], 512
    $region49: #{tpu_custom_call.1} parent=1 // pred_fallthru
      _
    // Predicated region
    $region50: #{tpu_custom_call.1} parent=1 // pred_check
      _
    $region51: #{tpu_custom_call.1} parent=1 // pred_check_branch
      %78 = sbr.rel (0) target = $region53
    $region52: #{tpu_custom_call.1} parent=1 // pred_region
      %79 = dma.done [#allocation9], 512
    $region53: #{tpu_custom_call.1} parent=1 // pred_fallthru
      _
    %v80 = vld [vmem:[%s0] sm:$0xff]
    %v81 = vld [vmem:[%s0 + $0x8] sm:$0xff]
    %v82 = vld [vmem:[%s0 + $0x10] sm:$0xff]
    %v83 = vld [vmem:[%s0 + $0x18] sm:$0xff]
    %v84 = vld [vmem:[%s0 + $0x20] sm:$0xff]
    %v85 = vld [vmem:[%s0 + $0x28] sm:$0xff]
    %v86 = vld [vmem:[%s0 + $0x30] sm:$0xff]
    %v87 = vld [vmem:[%s0 + $0x38] sm:$0xff]
    %v88 = vld [vmem:[%s2] sm:$0xff]
    %v89 = vld [vmem:[%s2 + $0x8] sm:$0xff]
    %v90 = vld [vmem:[%s2 + $0x10] sm:$0xff]
    %v91 = vld [vmem:[%s2 + $0x18] sm:$0xff]
    %v92 = vld [vmem:[%s2 + $0x20] sm:$0xff]
    %v93 = vld [vmem:[%s2 + $0x28] sm:$0xff]
    %v94 = vld [vmem:[%s2 + $0x30] sm:$0xff]
    %v95 = vld [vmem:[%s2 + $0x38] sm:$0xff]
    %v96 = vld [vmem:[%s3] sm:$0x3]
    %v98 = vlaneseq
    %v99 = vshrl.u32 %v98, 7
    %v100 = vsub.s32 0, %v99
    %v101 = vrot.slane %v96, %v100
    %v102 = vlaneseq
    %v103 = vshrl.u32 %v102, 7
    %v104 = vsub.s32 1, %v103
    %v105 = vrot.slane %v96, %v104
    %vm108 = vcmask 261120
    %v110 = vsel %vm108, %v80, 0
    %v113 = vsel %vm108, %v81, 0
    %v116 = vsel %vm108, %v82, 0
    %v119 = vsel %vm108, %v83, 0
    %v122 = vsel %vm108, %v84, 0
    %v125 = vsel %vm108, %v85, 0
    %v128 = vsel %vm108, %v86, 0
    %v131 = vsel %vm108, %v87, 0
    %133 = vmatprep.subr.mxu0 %v89
    %134 = vmatpush1.msra.mxu0 %v88
    %135 = vmatprep.subr.mxu0 %v91
    %136 = vmatpush1.msra.mxu0 %v90
    %137 = vmatprep.subr.mxu0 %v93
    %138 = vmatpush1.msra.mxu0 %v92
    %139 = vmatprep.subr.mxu0 %v95
    %140 = vmatpush1.msra.mxu0 %v94
    %141 = vmatprep.subr.mxu0 0.0
    %142 = vmatpush1.msra.mxu0 0.0
    %143 = vmatprep.subr.mxu0 0.0
    %144 = vmatpush1.msra.mxu0 0.0
    %145 = vmatprep.subr.mxu0 0.0
    %146 = vmatpush1.msra.mxu0 0.0
    %147 = vmatprep.subr.mxu0 0.0
    %148 = vmatpush1.msra.mxu0 0.0
    %149 = vmatprep.subr.mxu0 0.0
    %150 = vmatpush1.msra.mxu0 0.0
    %151 = vmatprep.subr.mxu0 0.0
    %152 = vmatpush1.msra.mxu0 0.0
    %153 = vmatprep.subr.mxu0 0.0
    %154 = vmatpush1.msra.mxu0 0.0
    %155 = vmatprep.subr.mxu0 0.0
    %156 = vmatpush1.msra.mxu0 0.0
    %157 = vmatprep.subr.mxu0 0.0
    %158 = vmatpush1.msra.mxu0 0.0
    %159 = vmatprep.subr.mxu0 0.0
    %160 = vmatpush1.msra.mxu0 0.0
    %161 = vmatprep.subr.mxu0 0.0
    %162 = vmatpush1.msra.mxu0 0.0
    %163 = vmatprep.subr.mxu0 0.0
    %164 = vmatpush1.msra.mxu0 0.0
    %165 = vmatprep.subr.mxu0 0.0
    %166 = vmatpush1.msra.mxu0 0.0
    %167 = vmatprep.subr.mxu0 0.0
    %168 = vmatpush1.msra.mxu0 0.0
    %169 = vmatprep.subr.mxu0 0.0
    %170 = vmatpush1.msra.mxu0 0.0
    %171 = vmatprep.subr.mxu0 0.0
    %172 = vmatpush1.msra.mxu0 0.0
    %173 = vmatprep.subr.mxu0 0.0
    %174 = vmatpush1.msra.mxu0 0.0
    %175 = vmatprep.subr.mxu0 0.0
    %176 = vmatpush1.msra.mxu0 0.0
    %177 = vmatprep.subr.mxu0 0.0
    %178 = vmatpush1.msra.mxu0 0.0
    %179 = vmatprep.subr.mxu0 0.0
    %180 = vmatpush1.msra.mxu0 0.0
    %181 = vmatprep.subr.mxu0 0.0
    %182 = vmatpush1.msra.mxu0 0.0
    %183 = vmatprep.subr.mxu0 0.0
    %184 = vmatpush1.msra.mxu0 0.0
    %185 = vmatprep.subr.mxu0 0.0
    %186 = vmatpush1.msra.mxu0 0.0
    %187 = vmatprep.subr.mxu0 0.0
    %188 = vmatpush1.msra.mxu0 0.0
    %189 = vmatprep.subr.mxu0 0.0
    %190 = vmatpush1.msra.mxu0 0.0
    %191 = vmatprep.subr.mxu0 0.0
    %192 = vmatpush1.msra.mxu0 0.0
    %193 = vmatprep.subr.mxu0 0.0
    %194 = vmatpush1.msra.mxu0 0.0
    %195 = vmatprep.subr.mxu0 0.0
    %196 = vmatpush1.msra.mxu0 0.0
    %197 = vmatprep.mubr.f32.mxu0 0.0
    %198 = vmatmul.mubr.f32.gmra.mrb[0].mxu0 %v110
    %v199 = vpop.f32.mrb[0].mxu0
    %v200 = vadd.f32 %v101, %v199
    %v201 = vpop.f32.mrb[0].mxu0
    %v202 = vadd.f32 %v105, %v201
    %203 = vmatprep.mubr.f32.mxu0 0.0
    %204 = vmatmul.mubr.f32.gmra.mrb[0].mxu0 %v113
    %v205 = vpop.f32.mrb[0].mxu0
    %v206 = vadd.f32 %v101, %v205
    %v207 = vpop.f32.mrb[0].mxu0
    %v208 = vadd.f32 %v105, %v207
    %209 = vmatprep.mubr.f32.mxu0 0.0
    %210 = vmatmul.mubr.f32.gmra.mrb[0].mxu0 %v116
    %v211 = vpop.f32.mrb[0].mxu0
    %v212 = vadd.f32 %v101, %v211
    %v213 = vpop.f32.mrb[0].mxu0
    %v214 = vadd.f32 %v105, %v213
    %215 = vmatprep.mubr.f32.mxu0 0.0
    %216 = vmatmul.mubr.f32.gmra.mrb[0].mxu0 %v119
    %v217 = vpop.f32.mrb[0].mxu0
    %v218 = vadd.f32 %v101, %v217
    %v219 = vpop.f32.mrb[0].mxu0
    %v220 = vadd.f32 %v105, %v219
    %221 = vmatprep.mubr.f32.mxu0 0.0
    %222 = vmatmul.mubr.f32.gmra.mrb[0].mxu0 %v122
    %v223 = vpop.f32.mrb[0].mxu0
    %v224 = vadd.f32 %v101, %v223
    %v225 = vpop.f32.mrb[0].mxu0
    %v226 = vadd.f32 %v105, %v225
    %227 = vmatprep.mubr.f32.mxu0 0.0
    %228 = vmatmul.mubr.f32.gmra.mrb[0].mxu0 %v125
    %v229 = vpop.f32.mrb[0].mxu0
    %v230 = vadd.f32 %v101, %v229
    %v231 = vpop.f32.mrb[0].mxu0
    %v232 = vadd.f32 %v105, %v231
    %233 = vmatprep.mubr.f32.mxu0 0.0
    %234 = vmatmul.mubr.f32.gmra.mrb[0].mxu0 %v128
    %v235 = vpop.f32.mrb[0].mxu0
    %v236 = vadd.f32 %v101, %v235
    %v237 = vpop.f32.mrb[0].mxu0
    %v238 = vadd.f32 %v105, %v237
    %239 = vmatprep.mubr.f32.mxu0 0.0
    %240 = vmatmul.mubr.f32.gmra.mrb[0].mxu0 %v131
    %v241 = vpop.f32.mrb[0].mxu0
    %v242 = vadd.f32 %v101, %v241
    %v243 = vpop.f32.mrb[0].mxu0
    %v244 = vadd.f32 %v105, %v243
    %245 = vdwg.mxu0
    %246 = vst [vmem:[#allocation2] sm:$0xff] %v200
    %247 = vst [vmem:[#allocation2 + $0x8] sm:$0xff] %v202
    %248 = vst [vmem:[#allocation2 + $0x10] sm:$0xff] %v206
    %249 = vst [vmem:[#allocation2 + $0x18] sm:$0xff] %v208
    %250 = vst [vmem:[#allocation2 + $0x20] sm:$0xff] %v212
    %251 = vst [vmem:[#allocation2 + $0x28] sm:$0xff] %v214
    %252 = vst [vmem:[#allocation2 + $0x30] sm:$0xff] %v218
    %253 = vst [vmem:[#allocation2 + $0x38] sm:$0xff] %v220
    %254 = vst [vmem:[#allocation2 + $0x40] sm:$0xff] %v224
    %255 = vst [vmem:[#allocation2 + $0x48] sm:$0xff] %v226
    %256 = vst [vmem:[#allocation2 + $0x50] sm:$0xff] %v230
    %257 = vst [vmem:[#allocation2 + $0x58] sm:$0xff] %v232
    %258 = vst [vmem:[#allocation2 + $0x60] sm:$0xff] %v236
    %259 = vst [vmem:[#allocation2 + $0x68] sm:$0xff] %v238
    %260 = vst [vmem:[#allocation2 + $0x70] sm:$0xff] %v242
    %261 = vst [vmem:[#allocation2 + $0x78] sm:$0xff] %v244
    %v262 = vld [vmem:[#allocation5] sm:$0xff]
    %v263 = vld [vmem:[#allocation5 + $0x8] sm:$0xff]
    %v264 = vld [vmem:[#allocation5 + $0x10] sm:$0xff]
    %v265 = vld [vmem:[#allocation5 + $0x18] sm:$0xff]
    %v266 = vld [vmem:[#allocation5 + $0x20] sm:$0xff]
    %v267 = vld [vmem:[#allocation5 + $0x28] sm:$0xff]
    %v268 = vld [vmem:[#allocation5 + $0x30] sm:$0xff]
    %v269 = vld [vmem:[#allocation5 + $0x38] sm:$0xff]
    %v270 = vld [vmem:[#allocation5 + $0x40] sm:$0xff]
    %v271 = vld [vmem:[#allocation5 + $0x48] sm:$0xff]
    %v272 = vld [vmem:[#allocation5 + $0x50] sm:$0xff]
    %v273 = vld [vmem:[#allocation5 + $0x58] sm:$0xff]
    %v274 = vld [vmem:[#allocation5 + $0x60] sm:$0xff]
    %v275 = vld [vmem:[#allocation5 + $0x68] sm:$0xff]
    %v276 = vld [vmem:[#allocation5 + $0x70] sm:$0xff]
    %v277 = vld [vmem:[#allocation5 + $0x78] sm:$0xff]
    %v278 = vld [vmem:[%s1] sm:$0xff]
    %279 = vset.pattern.permute.xlu0 0
    %280 = vperm.xlu0 %279, %v278
    %v281 = vpop.permute.xlu0 %280
    %v282 = vlaneseq
    %v283 = vand.u32 %v282, 127
    %vm284 = vcmp.lt.s32.totalorder %v283, 32
    %s285 = smul.u32 0, 2
    %s286 = smul.addr %s285, 8
    %s287 = scalar_lea.vmem [#allocation2], %s286
    %v288 = vld [vmem:[%s287] sm:$0xff]
    %v289 = vld [vmem:[%s287 + $0x8] sm:$0xff]
    %vm290 = vcmask 523264
    %v292 = vsel %vm290, 0.0, 0
    %294 = vmatprep.subr.mxu0 %v263
    %295 = vmatpush1.msra.mxu0 %v262
    %296 = vmatprep.subr.mxu0 %v265
    %297 = vmatpush1.msra.mxu0 %v264
    %298 = vmatprep.subr.mxu0 %v267
    %299 = vmatpush1.msra.mxu0 %v266
    %300 = vmatprep.subr.mxu0 %v269
    %301 = vmatpush1.msra.mxu0 %v268
    %302 = vmatprep.subr.mxu0 %v271
    %303 = vmatpush1.msra.mxu0 %v270
    %304 = vmatprep.subr.mxu0 %v273
    %305 = vmatpush1.msra.mxu0 %v272
    %306 = vmatprep.subr.mxu0 %v275
    %307 = vmatpush1.msra.mxu0 %v274
    %308 = vmatprep.subr.mxu0 %v277
    %309 = vmatpush1.msra.mxu0 %v276
    %310 = vmatprep.subr.mxu0 0.0
    %311 = vmatpush1.msra.mxu0 0.0
    %312 = vmatprep.subr.mxu0 0.0
    %313 = vmatpush1.msra.mxu0 0.0
    %314 = vmatprep.subr.mxu0 0.0
    %315 = vmatpush1.msra.mxu0 0.0
    %316 = vmatprep.subr.mxu0 0.0
    %317 = vmatpush1.msra.mxu0 0.0
    %318 = vmatprep.subr.mxu0 0.0
    %319 = vmatpush1.msra.mxu0 0.0
    %320 = vmatprep.subr.mxu0 0.0
    %321 = vmatpush1.msra.mxu0 0.0
    %322 = vmatprep.subr.mxu0 0.0
    %323 = vmatpush1.msra.mxu0 0.0
    %324 = vmatprep.subr.mxu0 0.0
    %325 = vmatpush1.msra.mxu0 0.0
    %326 = vmatprep.subr.mxu0 0.0
    %327 = vmatpush1.msra.mxu0 0.0
    %328 = vmatprep.subr.mxu0 0.0
    %329 = vmatpush1.msra.mxu0 0.0
    %330 = vmatprep.subr.mxu0 0.0
    %331 = vmatpush1.msra.mxu0 0.0
    %332 = vmatprep.subr.mxu0 0.0
    %333 = vmatpush1.msra.mxu0 0.0
    %334 = vmatprep.subr.mxu0 0.0
    %335 = vmatpush1.msra.mxu0 0.0
    %336 = vmatprep.subr.mxu0 0.0
    %337 = vmatpush1.msra.mxu0 0.0
    %338 = vmatprep.subr.mxu0 0.0
    %339 = vmatpush1.msra.mxu0 0.0
    %340 = vmatprep.subr.mxu0 0.0
    %341 = vmatpush1.msra.mxu0 0.0
    %342 = vmatprep.subr.mxu0 0.0
    %343 = vmatpush1.msra.mxu0 0.0
    %344 = vmatprep.subr.mxu0 0.0
    %345 = vmatpush1.msra.mxu0 0.0
    %346 = vmatprep.subr.mxu0 0.0
    %347 = vmatpush1.msra.mxu0 0.0
    %348 = vmatprep.subr.mxu0 0.0
    %349 = vmatpush1.msra.mxu0 0.0
    %350 = vmatprep.subr.mxu0 0.0
    %351 = vmatpush1.msra.mxu0 0.0
    %352 = vmatprep.subr.mxu0 0.0
    %353 = vmatpush1.msra.mxu0 0.0
    %354 = vmatprep.subr.mxu0 0.0
    %355 = vmatpush1.msra.mxu0 0.0
    %356 = vmatprep.subr.mxu0 0.0
    %357 = vmatpush1.msra.mxu0 0.0
    %358 = vmatprep.mubr.f32.mxu0 0.0
    %359 = vmatmul.mubr.f32.gmra.mrb[0].mxu0 %v292
    %v360 = vpop.f32.mrb[0].mxu0
    %v361 = vadd.f32 0.0, %v360
    %v362 = vpop.f32.mrb[0].mxu0
    %v363 = vadd.f32 0.0, %v362
    %364 = vdwg.mxu0
    %v365 = vadd.f32 %v288, %v361
    %v366 = vadd.f32 %v289, %v363
    %v367 = vxor.u32 %v365, 2147483648
    %v368 = vxor.u32 %v366, 2147483648
    %v369 = vmul.f32 %v367, 1.442695
    %v370 = vpow.pop %v369
    %v371 = vmul.f32 %v368, 1.442695
    %v372 = vpow.pop %v371
    %v373 = vadd.f32 %v370, 1.0
    %v374 = vadd.f32 %v372, 1.0
    %v375 = vrcp.pop %v373
    %v376 = vmul.f32 1.0, %v375
    %v377 = vrcp.pop %v374
    %v378 = vmul.f32 1.0, %v377
    %v379 = vtanh.pop %v366
    %v380 = vmul.f32 %v376, 0.0
    %382 = vrot.lane.b32.xlu0 %v379, 64
    %v383 = vpop.permute.xlu0 %382
    %v385 = vmul.f32 %v376, %v383
    %387 = vrot.lane.b32.xlu0 %v385, 64
    %v388 = vpop.permute.xlu0 %387
    %v390 = vadd.f32 %v380, %v388
    %v391 = vtanh.pop %v390
    %393 = vrot.lane.b32.xlu0 %v391, 64
    %v394 = vpop.permute.xlu0 %393
    %v396 = vmul.f32 %v378, %v394
    %v397 = vsel %vm284, 0, 7
    %vm398 = vcmp.lt.s32.totalorder %v397, %v281
    %v399 = vsel %vm398, %v396, 0.0
    %400 = vst.msk [vmem:[#allocation3] sm:$0xff] %vm108, %v399
    %402 = vrot.lane.b32.xlu0 %v399, 96
    %v403 = vpop.permute.xlu0 %402
    %s405 = scalar_lea.vmem [#allocation4], 56
    %406 = vst.msk [vmem:[%s405] sm:$0xff] %vm108, %v403
    %408 = vrot.lane.b32.xlu0 %v390, 64
    %v409 = vpop.permute.xlu0 %408
    %v411 = vsel %vm398, %v409, 0.0
    %s412 = smul.u32 1, 2
    %s413 = smul.addr %s412, 8
    %s414 = scalar_lea.vmem [#allocation2], %s413
    %v415 = vld [vmem:[%s414] sm:$0xff]
    %v416 = vld [vmem:[%s414 + $0x8] sm:$0xff]
    %v417 = vsel %vm290, %v399, 0
    %419 = vmatprep.subr.mxu0 %v263
    %420 = vmatpush1.msra.mxu0 %v262
    %421 = vmatprep.subr.mxu0 %v265
    %422 = vmatpush1.msra.mxu0 %v264
    %423 = vmatprep.subr.mxu0 %v267
    %424 = vmatpush1.msra.mxu0 %v266
    %425 = vmatprep.subr.mxu0 %v269
    %426 = vmatpush1.msra.mxu0 %v268
    %427 = vmatprep.subr.mxu0 %v271
    %428 = vmatpush1.msra.mxu0 %v270
    %429 = vmatprep.subr.mxu0 %v273
    %430 = vmatpush1.msra.mxu0 %v272
    %431 = vmatprep.subr.mxu0 %v275
    %432 = vmatpush1.msra.mxu0 %v274
    %433 = vmatprep.subr.mxu0 %v277
    %434 = vmatpush1.msra.mxu0 %v276
    %435 = vmatprep.subr.mxu0 0.0
    %436 = vmatpush1.msra.mxu0 0.0
    %437 = vmatprep.subr.mxu0 0.0
    %438 = vmatpush1.msra.mxu0 0.0
    %439 = vmatprep.subr.mxu0 0.0
    %440 = vmatpush1.msra.mxu0 0.0
    %441 = vmatprep.subr.mxu0 0.0
    %442 = vmatpush1.msra.mxu0 0.0
    %443 = vmatprep.subr.mxu0 0.0
    %444 = vmatpush1.msra.mxu0 0.0
    %445 = vmatprep.subr.mxu0 0.0
    %446 = vmatpush1.msra.mxu0 0.0
    %447 = vmatprep.subr.mxu0 0.0
    %448 = vmatpush1.msra.mxu0 0.0
    %449 = vmatprep.subr.mxu0 0.0
    %450 = vmatpush1.msra.mxu0 0.0
    %451 = vmatprep.subr.mxu0 0.0
    %452 = vmatpush1.msra.mxu0 0.0
    %453 = vmatprep.subr.mxu0 0.0
    %454 = vmatpush1.msra.mxu0 0.0
    %455 = vmatprep.subr.mxu0 0.0
    %456 = vmatpush1.msra.mxu0 0.0
    %457 = vmatprep.subr.mxu0 0.0
    %458 = vmatpush1.msra.mxu0 0.0
    %459 = vmatprep.subr.mxu0 0.0
    %460 = vmatpush1.msra.mxu0 0.0
    %461 = vmatprep.subr.mxu0 0.0
    %462 = vmatpush1.msra.mxu0 0.0
    %463 = vmatprep.subr.mxu0 0.0
    %464 = vmatpush1.msra.mxu0 0.0
    %465 = vmatprep.subr.mxu0 0.0
    %466 = vmatpush1.msra.mxu0 0.0
    %467 = vmatprep.subr.mxu0 0.0
    %468 = vmatpush1.msra.mxu0 0.0
    %469 = vmatprep.subr.mxu0 0.0
    %470 = vmatpush1.msra.mxu0 0.0
    %471 = vmatprep.subr.mxu0 0.0
    %472 = vmatpush1.msra.mxu0 0.0
    %473 = vmatprep.subr.mxu0 0.0
    %474 = vmatpush1.msra.mxu0 0.0
    %475 = vmatprep.subr.mxu0 0.0
    %476 = vmatpush1.msra.mxu0 0.0
    %477 = vmatprep.subr.mxu0 0.0
    %478 = vmatpush1.msra.mxu0 0.0
    %479 = vmatprep.subr.mxu0 0.0
    %480 = vmatpush1.msra.mxu0 0.0
    %481 = vmatprep.subr.mxu0 0.0
    %482 = vmatpush1.msra.mxu0 0.0
    %483 = vmatprep.mubr.f32.mxu0 0.0
    %484 = vmatmul.mubr.f32.gmra.mrb[0].mxu0 %v417
    %v485 = vpop.f32.mrb[0].mxu0
    %v486 = vadd.f32 0.0, %v485
    %v487 = vpop.f32.mrb[0].mxu0
    %v488 = vadd.f32 0.0, %v487
    %489 = vdwg.mxu0
    %v490 = vadd.f32 %v415, %v486
    %v491 = vadd.f32 %v416, %v488
    %v492 = vxor.u32 %v490, 2147483648
    %v493 = vxor.u32 %v491, 2147483648
    %v494 = vmul.f32 %v492, 1.442695
    %v495 = vpow.pop %v494
    %v496 = vmul.f32 %v493, 1.442695
    %v497 = vpow.pop %v496
    %v498 = vadd.f32 %v495, 1.0
    %v499 = vadd.f32 %v497, 1.0
    %v500 = vrcp.pop %v498
    %v501 = vmul.f32 1.0, %v500
    %v502 = vrcp.pop %v499
    %v503 = vmul.f32 1.0, %v502
    %v504 = vtanh.pop %v491
    %506 = vrot.lane.b32.xlu0 %v411, 64
    %v507 = vpop.permute.xlu0 %506
    %v509 = vmul.f32 %v501, %v507
    %511 = vrot.lane.b32.xlu0 %v504, 64
    %v512 = vpop.permute.xlu0 %511
    %v514 = vmul.f32 %v501, %v512
    %516 = vrot.lane.b32.xlu0 %v514, 64
    %v517 = vpop.permute.xlu0 %516
    %v519 = vadd.f32 %v509, %v517
    %v520 = vtanh.pop %v519
    %522 = vrot.lane.b32.xlu0 %v520, 64
    %v523 = vpop.permute.xlu0 %522
    %v525 = vmul.f32 %v503, %v523
    %v526 = vsel %vm284, 1, 6
    %vm527 = vcmp.lt.s32.totalorder %v526, %v281
    %v528 = vsel %vm527, %v525, 0.0
    %s529 = scalar_lea.vmem [#allocation3], 8
    %530 = vst.msk [vmem:[%s529] sm:$0xff] %vm108, %v528
    %532 = vrot.lane.b32.xlu0 %v528, 96
    %v533 = vpop.permute.xlu0 %532
    %s535 = scalar_lea.vmem [#allocation4], 48
    %536 = vst.msk [vmem:[%s535] sm:$0xff] %vm108, %v533
    %v537 = vsel %vm527, %v525, %v399
    %539 = vrot.lane.b32.xlu0 %v519, 64
    %v540 = vpop.permute.xlu0 %539
    %v542 = vsel %vm527, %v540, %v411
    %s543 = smul.u32 2, 2
    %s544 = smul.addr %s543, 8
    %s545 = scalar_lea.vmem [#allocation2], %s544
    %v546 = vld [vmem:[%s545] sm:$0xff]
    %v547 = vld [vmem:[%s545 + $0x8] sm:$0xff]
    %v549 = vsel %vm290, %v537, 0
    %551 = vmatprep.subr.mxu0 %v263
    %552 = vmatpush1.msra.mxu0 %v262
    %553 = vmatprep.subr.mxu0 %v265
    %554 = vmatpush1.msra.mxu0 %v264
    %555 = vmatprep.subr.mxu0 %v267
    %556 = vmatpush1.msra.mxu0 %v266
    %557 = vmatprep.subr.mxu0 %v269
    %558 = vmatpush1.msra.mxu0 %v268
    %559 = vmatprep.subr.mxu0 %v271
    %560 = vmatpush1.msra.mxu0 %v270
    %561 = vmatprep.subr.mxu0 %v273
    %562 = vmatpush1.msra.mxu0 %v272
    %563 = vmatprep.subr.mxu0 %v275
    %564 = vmatpush1.msra.mxu0 %v274
    %565 = vmatprep.subr.mxu0 %v277
    %566 = vmatpush1.msra.mxu0 %v276
    %567 = vmatprep.subr.mxu0 0.0
    %568 = vmatpush1.msra.mxu0 0.0
    %569 = vmatprep.subr.mxu0 0.0
    %570 = vmatpush1.msra.mxu0 0.0
    %571 = vmatprep.subr.mxu0 0.0
    %572 = vmatpush1.msra.mxu0 0.0
    %573 = vmatprep.subr.mxu0 0.0
    %574 = vmatpush1.msra.mxu0 0.0
    %575 = vmatprep.subr.mxu0 0.0
    %576 = vmatpush1.msra.mxu0 0.0
    %577 = vmatprep.subr.mxu0 0.0
    %578 = vmatpush1.msra.mxu0 0.0
    %579 = vmatprep.subr.mxu0 0.0
    %580 = vmatpush1.msra.mxu0 0.0
    %581 = vmatprep.subr.mxu0 0.0
    %582 = vmatpush1.msra.mxu0 0.0
    %583 = vmatprep.subr.mxu0 0.0
    %584 = vmatpush1.msra.mxu0 0.0
    %585 = vmatprep.subr.mxu0 0.0
    %586 = vmatpush1.msra.mxu0 0.0
    %587 = vmatprep.subr.mxu0 0.0
    %588 = vmatpush1.msra.mxu0 0.0
    %589 = vmatprep.subr.mxu0 0.0
    %590 = vmatpush1.msra.mxu0 0.0
    %591 = vmatprep.subr.mxu0 0.0
    %592 = vmatpush1.msra.mxu0 0.0
    %593 = vmatprep.subr.mxu0 0.0
    %594 = vmatpush1.msra.mxu0 0.0
    %595 = vmatprep.subr.mxu0 0.0
    %596 = vmatpush1.msra.mxu0 0.0
    %597 = vmatprep.subr.mxu0 0.0
    %598 = vmatpush1.msra.mxu0 0.0
    %599 = vmatprep.subr.mxu0 0.0
    %600 = vmatpush1.msra.mxu0 0.0
    %601 = vmatprep.subr.mxu0 0.0
    %602 = vmatpush1.msra.mxu0 0.0
    %603 = vmatprep.subr.mxu0 0.0
    %604 = vmatpush1.msra.mxu0 0.0
    %605 = vmatprep.subr.mxu0 0.0
    %606 = vmatpush1.msra.mxu0 0.0
    %607 = vmatprep.subr.mxu0 0.0
    %608 = vmatpush1.msra.mxu0 0.0
    %609 = vmatprep.subr.mxu0 0.0
    %610 = vmatpush1.msra.mxu0 0.0
    %611 = vmatprep.subr.mxu0 0.0
    %612 = vmatpush1.msra.mxu0 0.0
    %613 = vmatprep.subr.mxu0 0.0
    %614 = vmatpush1.msra.mxu0 0.0
    %615 = vmatprep.mubr.f32.mxu0 0.0
    %616 = vmatmul.mubr.f32.gmra.mrb[0].mxu0 %v549
    %v617 = vpop.f32.mrb[0].mxu0
    %v618 = vadd.f32 0.0, %v617
    %v619 = vpop.f32.mrb[0].mxu0
    %v620 = vadd.f32 0.0, %v619
    %621 = vdwg.mxu0
    %v622 = vadd.f32 %v546, %v618
    %v623 = vadd.f32 %v547, %v620
    %v624 = vxor.u32 %v622, 2147483648
    %v625 = vxor.u32 %v623, 2147483648
    %v626 = vmul.f32 %v624, 1.442695
    %v627 = vpow.pop %v626
    %v628 = vmul.f32 %v625, 1.442695
    %v629 = vpow.pop %v628
    %v630 = vadd.f32 %v627, 1.0
    %v631 = vadd.f32 %v629, 1.0
    %v632 = vrcp.pop %v630
    %v633 = vmul.f32 1.0, %v632
    %v634 = vrcp.pop %v631
    %v635 = vmul.f32 1.0, %v634
    %v636 = vtanh.pop %v623
    %638 = vrot.lane.b32.xlu0 %v542, 64
    %v639 = vpop.permute.xlu0 %638
    %v641 = vmul.f32 %v633, %v639
    %643 = vrot.lane.b32.xlu0 %v636, 64
    %v644 = vpop.permute.xlu0 %643
    %v646 = vmul.f32 %v633, %v644
    %648 = vrot.lane.b32.xlu0 %v646, 64
    %v649 = vpop.permute.xlu0 %648
    %v651 = vadd.f32 %v641, %v649
    %v652 = vtanh.pop %v651
    %654 = vrot.lane.b32.xlu0 %v652, 64
    %v655 = vpop.permute.xlu0 %654
    %v657 = vmul.f32 %v635, %v655
    %v658 = vsel %vm284, 2, 5
    %vm659 = vcmp.lt.s32.totalorder %v658, %v281
    %v660 = vsel %vm659, %v657, 0.0
    %s661 = scalar_lea.vmem [#allocation3], 16
    %662 = vst.msk [vmem:[%s661] sm:$0xff] %vm108, %v660
    %664 = vrot.lane.b32.xlu0 %v660, 96
    %v665 = vpop.permute.xlu0 %664
    %s667 = scalar_lea.vmem [#allocation4], 40
    %668 = vst.msk [vmem:[%s667] sm:$0xff] %vm108, %v665
    %v669 = vsel %vm659, %v657, %v537
    %671 = vrot.lane.b32.xlu0 %v651, 64
    %v672 = vpop.permute.xlu0 %671
    %v674 = vsel %vm659, %v672, %v542
    %s675 = smul.u32 3, 2
    %s676 = smul.addr %s675, 8
    %s677 = scalar_lea.vmem [#allocation2], %s676
    %v678 = vld [vmem:[%s677] sm:$0xff]
    %v679 = vld [vmem:[%s677 + $0x8] sm:$0xff]
    %v681 = vsel %vm290, %v669, 0
    %683 = vmatprep.subr.mxu0 %v263
    %684 = vmatpush1.msra.mxu0 %v262
    %685 = vmatprep.subr.mxu0 %v265
    %686 = vmatpush1.msra.mxu0 %v264
    %687 = vmatprep.subr.mxu0 %v267
    %688 = vmatpush1.msra.mxu0 %v266
    %689 = vmatprep.subr.mxu0 %v269
    %690 = vmatpush1.msra.mxu0 %v268
    %691 = vmatprep.subr.mxu0 %v271
    %692 = vmatpush1.msra.mxu0 %v270
    %693 = vmatprep.subr.mxu0 %v273
    %694 = vmatpush1.msra.mxu0 %v272
    %695 = vmatprep.subr.mxu0 %v275
    %696 = vmatpush1.msra.mxu0 %v274
    %697 = vmatprep.subr.mxu0 %v277
    %698 = vmatpush1.msra.mxu0 %v276
    %699 = vmatprep.subr.mxu0 0.0
    %700 = vmatpush1.msra.mxu0 0.0
    %701 = vmatprep.subr.mxu0 0.0
    %702 = vmatpush1.msra.mxu0 0.0
    %703 = vmatprep.subr.mxu0 0.0
    %704 = vmatpush1.msra.mxu0 0.0
    %705 = vmatprep.subr.mxu0 0.0
    %706 = vmatpush1.msra.mxu0 0.0
    %707 = vmatprep.subr.mxu0 0.0
    %708 = vmatpush1.msra.mxu0 0.0
    %709 = vmatprep.subr.mxu0 0.0
    %710 = vmatpush1.msra.mxu0 0.0
    %711 = vmatprep.subr.mxu0 0.0
    %712 = vmatpush1.msra.mxu0 0.0
    %713 = vmatprep.subr.mxu0 0.0
    %714 = vmatpush1.msra.mxu0 0.0
    %715 = vmatprep.subr.mxu0 0.0
    %716 = vmatpush1.msra.mxu0 0.0
    %717 = vmatprep.subr.mxu0 0.0
    %718 = vmatpush1.msra.mxu0 0.0
    %719 = vmatprep.subr.mxu0 0.0
    %720 = vmatpush1.msra.mxu0 0.0
    %721 = vmatprep.subr.mxu0 0.0
    %722 = vmatpush1.msra.mxu0 0.0
    %723 = vmatprep.subr.mxu0 0.0
    %724 = vmatpush1.msra.mxu0 0.0
    %725 = vmatprep.subr.mxu0 0.0
    %726 = vmatpush1.msra.mxu0 0.0
    %727 = vmatprep.subr.mxu0 0.0
    %728 = vmatpush1.msra.mxu0 0.0
    %729 = vmatprep.subr.mxu0 0.0
    %730 = vmatpush1.msra.mxu0 0.0
    %731 = vmatprep.subr.mxu0 0.0
    %732 = vmatpush1.msra.mxu0 0.0
    %733 = vmatprep.subr.mxu0 0.0
    %734 = vmatpush1.msra.mxu0 0.0
    %735 = vmatprep.subr.mxu0 0.0
    %736 = vmatpush1.msra.mxu0 0.0
    %737 = vmatprep.subr.mxu0 0.0
    %738 = vmatpush1.msra.mxu0 0.0
    %739 = vmatprep.subr.mxu0 0.0
    %740 = vmatpush1.msra.mxu0 0.0
    %741 = vmatprep.subr.mxu0 0.0
    %742 = vmatpush1.msra.mxu0 0.0
    %743 = vmatprep.subr.mxu0 0.0
    %744 = vmatpush1.msra.mxu0 0.0
    %745 = vmatprep.subr.mxu0 0.0
    %746 = vmatpush1.msra.mxu0 0.0
    %747 = vmatprep.mubr.f32.mxu0 0.0
    %748 = vmatmul.mubr.f32.gmra.mrb[0].mxu0 %v681
    %v749 = vpop.f32.mrb[0].mxu0
    %v750 = vadd.f32 0.0, %v749
    %v751 = vpop.f32.mrb[0].mxu0
    %v752 = vadd.f32 0.0, %v751
    %753 = vdwg.mxu0
    %v754 = vadd.f32 %v678, %v750
    %v755 = vadd.f32 %v679, %v752
    %v756 = vxor.u32 %v754, 2147483648
    %v757 = vxor.u32 %v755, 2147483648
    %v758 = vmul.f32 %v756, 1.442695
    %v759 = vpow.pop %v758
    %v760 = vmul.f32 %v757, 1.442695
    %v761 = vpow.pop %v760
    %v762 = vadd.f32 %v759, 1.0
    %v763 = vadd.f32 %v761, 1.0
    %v764 = vrcp.pop %v762
    %v765 = vmul.f32 1.0, %v764
    %v766 = vrcp.pop %v763
    %v767 = vmul.f32 1.0, %v766
    %v768 = vtanh.pop %v755
    %770 = vrot.lane.b32.xlu0 %v674, 64
    %v771 = vpop.permute.xlu0 %770
    %v773 = vmul.f32 %v765, %v771
    %775 = vrot.lane.b32.xlu0 %v768, 64
    %v776 = vpop.permute.xlu0 %775
    %v778 = vmul.f32 %v765, %v776
    %780 = vrot.lane.b32.xlu0 %v778, 64
    %v781 = vpop.permute.xlu0 %780
    %v783 = vadd.f32 %v773, %v781
    %v784 = vtanh.pop %v783
    %786 = vrot.lane.b32.xlu0 %v784, 64
    %v787 = vpop.permute.xlu0 %786
    %v789 = vmul.f32 %v767, %v787
    %v790 = vsel %vm284, 3, 4
    %vm791 = vcmp.lt.s32.totalorder %v790, %v281
    %v792 = vsel %vm791, %v789, 0.0
    %s793 = scalar_lea.vmem [#allocation3], 24
    %794 = vst.msk [vmem:[%s793] sm:$0xff] %vm108, %v792
    %796 = vrot.lane.b32.xlu0 %v792, 96
    %v797 = vpop.permute.xlu0 %796
    %s799 = scalar_lea.vmem [#allocation4], 32
    %800 = vst.msk [vmem:[%s799] sm:$0xff] %vm108, %v797
    %v801 = vsel %vm791, %v789, %v669
    %803 = vrot.lane.b32.xlu0 %v783, 64
    %v804 = vpop.permute.xlu0 %803
    %v806 = vsel %vm791, %v804, %v674
    %s807 = smul.u32 4, 2
    %s808 = smul.addr %s807, 8
    %s809 = scalar_lea.vmem [#allocation2], %s808
    %v810 = vld [vmem:[%s809] sm:$0xff]
    %v811 = vld [vmem:[%s809 + $0x8] sm:$0xff]
    %v813 = vsel %vm290, %v801, 0
    %815 = vmatprep.subr.mxu0 %v263
    %816 = vmatpush1.msra.mxu0 %v262
    %817 = vmatprep.subr.mxu0 %v265
    %818 = vmatpush1.msra.mxu0 %v264
    %819 = vmatprep.subr.mxu0 %v267
    %820 = vmatpush1.msra.mxu0 %v266
    %821 = vmatprep.subr.mxu0 %v269
    %822 = vmatpush1.msra.mxu0 %v268
    %823 = vmatprep.subr.mxu0 %v271
    %824 = vmatpush1.msra.mxu0 %v270
    %825 = vmatprep.subr.mxu0 %v273
    %826 = vmatpush1.msra.mxu0 %v272
    %827 = vmatprep.subr.mxu0 %v275
    %828 = vmatpush1.msra.mxu0 %v274
    %829 = vmatprep.subr.mxu0 %v277
    %830 = vmatpush1.msra.mxu0 %v276
    %831 = vmatprep.subr.mxu0 0.0
    %832 = vmatpush1.msra.mxu0 0.0
    %833 = vmatprep.subr.mxu0 0.0
    %834 = vmatpush1.msra.mxu0 0.0
    %835 = vmatprep.subr.mxu0 0.0
    %836 = vmatpush1.msra.mxu0 0.0
    %837 = vmatprep.subr.mxu0 0.0
    %838 = vmatpush1.msra.mxu0 0.0
    %839 = vmatprep.subr.mxu0 0.0
    %840 = vmatpush1.msra.mxu0 0.0
    %841 = vmatprep.subr.mxu0 0.0
    %842 = vmatpush1.msra.mxu0 0.0
    %843 = vmatprep.subr.mxu0 0.0
    %844 = vmatpush1.msra.mxu0 0.0
    %845 = vmatprep.subr.mxu0 0.0
    %846 = vmatpush1.msra.mxu0 0.0
    %847 = vmatprep.subr.mxu0 0.0
    %848 = vmatpush1.msra.mxu0 0.0
    %849 = vmatprep.subr.mxu0 0.0
    %850 = vmatpush1.msra.mxu0 0.0
    %851 = vmatprep.subr.mxu0 0.0
    %852 = vmatpush1.msra.mxu0 0.0
    %853 = vmatprep.subr.mxu0 0.0
    %854 = vmatpush1.msra.mxu0 0.0
    %855 = vmatprep.subr.mxu0 0.0
    %856 = vmatpush1.msra.mxu0 0.0
    %857 = vmatprep.subr.mxu0 0.0
    %858 = vmatpush1.msra.mxu0 0.0
    %859 = vmatprep.subr.mxu0 0.0
    %860 = vmatpush1.msra.mxu0 0.0
    %861 = vmatprep.subr.mxu0 0.0
    %862 = vmatpush1.msra.mxu0 0.0
    %863 = vmatprep.subr.mxu0 0.0
    %864 = vmatpush1.msra.mxu0 0.0
    %865 = vmatprep.subr.mxu0 0.0
    %866 = vmatpush1.msra.mxu0 0.0
    %867 = vmatprep.subr.mxu0 0.0
    %868 = vmatpush1.msra.mxu0 0.0
    %869 = vmatprep.subr.mxu0 0.0
    %870 = vmatpush1.msra.mxu0 0.0
    %871 = vmatprep.subr.mxu0 0.0
    %872 = vmatpush1.msra.mxu0 0.0
    %873 = vmatprep.subr.mxu0 0.0
    %874 = vmatpush1.msra.mxu0 0.0
    %875 = vmatprep.subr.mxu0 0.0
    %876 = vmatpush1.msra.mxu0 0.0
    %877 = vmatprep.subr.mxu0 0.0
    %878 = vmatpush1.msra.mxu0 0.0
    %879 = vmatprep.mubr.f32.mxu0 0.0
    %880 = vmatmul.mubr.f32.gmra.mrb[0].mxu0 %v813
    %v881 = vpop.f32.mrb[0].mxu0
    %v882 = vadd.f32 0.0, %v881
    %v883 = vpop.f32.mrb[0].mxu0
    %v884 = vadd.f32 0.0, %v883
    %885 = vdwg.mxu0
    %v886 = vadd.f32 %v810, %v882
    %v887 = vadd.f32 %v811, %v884
    %v888 = vxor.u32 %v886, 2147483648
    %v889 = vxor.u32 %v887, 2147483648
    %v890 = vmul.f32 %v888, 1.442695
    %v891 = vpow.pop %v890
    %v892 = vmul.f32 %v889, 1.442695
    %v893 = vpow.pop %v892
    %v894 = vadd.f32 %v891, 1.0
    %v895 = vadd.f32 %v893, 1.0
    %v896 = vrcp.pop %v894
    %v897 = vmul.f32 1.0, %v896
    %v898 = vrcp.pop %v895
    %v899 = vmul.f32 1.0, %v898
    %v900 = vtanh.pop %v887
    %902 = vrot.lane.b32.xlu0 %v806, 64
    %v903 = vpop.permute.xlu0 %902
    %v905 = vmul.f32 %v897, %v903
    %907 = vrot.lane.b32.xlu0 %v900, 64
    %v908 = vpop.permute.xlu0 %907
    %v910 = vmul.f32 %v897, %v908
    %912 = vrot.lane.b32.xlu0 %v910, 64
    %v913 = vpop.permute.xlu0 %912
    %v915 = vadd.f32 %v905, %v913
    %v916 = vtanh.pop %v915
    %918 = vrot.lane.b32.xlu0 %v916, 64
    %v919 = vpop.permute.xlu0 %918
    %v921 = vmul.f32 %v899, %v919
    %v922 = vsel %vm284, 4, 3
    %vm923 = vcmp.lt.s32.totalorder %v922, %v281
    %v924 = vsel %vm923, %v921, 0.0
    %s925 = scalar_lea.vmem [#allocation3], 32
    %926 = vst.msk [vmem:[%s925] sm:$0xff] %vm108, %v924
    %928 = vrot.lane.b32.xlu0 %v924, 96
    %v929 = vpop.permute.xlu0 %928
    %s931 = scalar_lea.vmem [#allocation4], 24
    %932 = vst.msk [vmem:[%s931] sm:$0xff] %vm108, %v929
    %v933 = vsel %vm923, %v921, %v801
    %935 = vrot.lane.b32.xlu0 %v915, 64
    %v936 = vpop.permute.xlu0 %935
    %v938 = vsel %vm923, %v936, %v806
    %s939 = smul.u32 5, 2
    %s940 = smul.addr %s939, 8
    %s941 = scalar_lea.vmem [#allocation2], %s940
    %v942 = vld [vmem:[%s941] sm:$0xff]
    %v943 = vld [vmem:[%s941 + $0x8] sm:$0xff]
    %v945 = vsel %vm290, %v933, 0
    %947 = vmatprep.subr.mxu0 %v263
    %948 = vmatpush1.msra.mxu0 %v262
    %949 = vmatprep.subr.mxu0 %v265
    %950 = vmatpush1.msra.mxu0 %v264
    %951 = vmatprep.subr.mxu0 %v267
    %952 = vmatpush1.msra.mxu0 %v266
    %953 = vmatprep.subr.mxu0 %v269
    %954 = vmatpush1.msra.mxu0 %v268
    %955 = vmatprep.subr.mxu0 %v271
    %956 = vmatpush1.msra.mxu0 %v270
    %957 = vmatprep.subr.mxu0 %v273
    %958 = vmatpush1.msra.mxu0 %v272
    %959 = vmatprep.subr.mxu0 %v275
    %960 = vmatpush1.msra.mxu0 %v274
    %961 = vmatprep.subr.mxu0 %v277
    %962 = vmatpush1.msra.mxu0 %v276
    %963 = vmatprep.subr.mxu0 0.0
    %964 = vmatpush1.msra.mxu0 0.0
    %965 = vmatprep.subr.mxu0 0.0
    %966 = vmatpush1.msra.mxu0 0.0
    %967 = vmatprep.subr.mxu0 0.0
    %968 = vmatpush1.msra.mxu0 0.0
    %969 = vmatprep.subr.mxu0 0.0
    %970 = vmatpush1.msra.mxu0 0.0
    %971 = vmatprep.subr.mxu0 0.0
    %972 = vmatpush1.msra.mxu0 0.0
    %973 = vmatprep.subr.mxu0 0.0
    %974 = vmatpush1.msra.mxu0 0.0
    %975 = vmatprep.subr.mxu0 0.0
    %976 = vmatpush1.msra.mxu0 0.0
    %977 = vmatprep.subr.mxu0 0.0
    %978 = vmatpush1.msra.mxu0 0.0
    %979 = vmatprep.subr.mxu0 0.0
    %980 = vmatpush1.msra.mxu0 0.0
    %981 = vmatprep.subr.mxu0 0.0
    %982 = vmatpush1.msra.mxu0 0.0
    %983 = vmatprep.subr.mxu0 0.0
    %984 = vmatpush1.msra.mxu0 0.0
    %985 = vmatprep.subr.mxu0 0.0
    %986 = vmatpush1.msra.mxu0 0.0
    %987 = vmatprep.subr.mxu0 0.0
    %988 = vmatpush1.msra.mxu0 0.0
    %989 = vmatprep.subr.mxu0 0.0
    %990 = vmatpush1.msra.mxu0 0.0
    %991 = vmatprep.subr.mxu0 0.0
    %992 = vmatpush1.msra.mxu0 0.0
    %993 = vmatprep.subr.mxu0 0.0
    %994 = vmatpush1.msra.mxu0 0.0
    %995 = vmatprep.subr.mxu0 0.0
    %996 = vmatpush1.msra.mxu0 0.0
    %997 = vmatprep.subr.mxu0 0.0
    %998 = vmatpush1.msra.mxu0 0.0
    %999 = vmatprep.subr.mxu0 0.0
    %1000 = vmatpush1.msra.mxu0 0.0
    %1001 = vmatprep.subr.mxu0 0.0
    %1002 = vmatpush1.msra.mxu0 0.0
    %1003 = vmatprep.subr.mxu0 0.0
    %1004 = vmatpush1.msra.mxu0 0.0
    %1005 = vmatprep.subr.mxu0 0.0
    %1006 = vmatpush1.msra.mxu0 0.0
    %1007 = vmatprep.subr.mxu0 0.0
    %1008 = vmatpush1.msra.mxu0 0.0
    %1009 = vmatprep.subr.mxu0 0.0
    %1010 = vmatpush1.msra.mxu0 0.0
    %1011 = vmatprep.mubr.f32.mxu0 0.0
    %1012 = vmatmul.mubr.f32.gmra.mrb[0].mxu0 %v945
    %v1013 = vpop.f32.mrb[0].mxu0
    %v1014 = vadd.f32 0.0, %v1013
    %v1015 = vpop.f32.mrb[0].mxu0
    %v1016 = vadd.f32 0.0, %v1015
    %1017 = vdwg.mxu0
    %v1018 = vadd.f32 %v942, %v1014
    %v1019 = vadd.f32 %v943, %v1016
    %v1020 = vxor.u32 %v1018, 2147483648
    %v1021 = vxor.u32 %v1019, 2147483648
    %v1022 = vmul.f32 %v1020, 1.442695
    %v1023 = vpow.pop %v1022
    %v1024 = vmul.f32 %v1021, 1.442695
    %v1025 = vpow.pop %v1024
    %v1026 = vadd.f32 %v1023, 1.0
    %v1027 = vadd.f32 %v1025, 1.0
    %v1028 = vrcp.pop %v1026
    %v1029 = vmul.f32 1.0, %v1028
    %v1030 = vrcp.pop %v1027
    %v1031 = vmul.f32 1.0, %v1030
    %v1032 = vtanh.pop %v1019
    %1034 = vrot.lane.b32.xlu0 %v938, 64
    %v1035 = vpop.permute.xlu0 %1034
    %v1037 = vmul.f32 %v1029, %v1035
    %1039 = vrot.lane.b32.xlu0 %v1032, 64
    %v1040 = vpop.permute.xlu0 %1039
    %v1042 = vmul.f32 %v1029, %v1040
    %1044 = vrot.lane.b32.xlu0 %v1042, 64
    %v1045 = vpop.permute.xlu0 %1044
    %v1047 = vadd.f32 %v1037, %v1045
    %v1048 = vtanh.pop %v1047
    %1050 = vrot.lane.b32.xlu0 %v1048, 64
    %v1051 = vpop.permute.xlu0 %1050
    %v1053 = vmul.f32 %v1031, %v1051
    %v1054 = vsel %vm284, 5, 2
    %vm1055 = vcmp.lt.s32.totalorder %v1054, %v281
    %v1056 = vsel %vm1055, %v1053, 0.0
    %s1057 = scalar_lea.vmem [#allocation3], 40
    %1058 = vst.msk [vmem:[%s1057] sm:$0xff] %vm108, %v1056
    %1060 = vrot.lane.b32.xlu0 %v1056, 96
    %v1061 = vpop.permute.xlu0 %1060
    %s1063 = scalar_lea.vmem [#allocation4], 16
    %1064 = vst.msk [vmem:[%s1063] sm:$0xff] %vm108, %v1061
    %v1065 = vsel %vm1055, %v1053, %v933
    %1067 = vrot.lane.b32.xlu0 %v1047, 64
    %v1068 = vpop.permute.xlu0 %1067
    %v1070 = vsel %vm1055, %v1068, %v938
    %s1071 = smul.u32 6, 2
    %s1072 = smul.addr %s1071, 8
    %s1073 = scalar_lea.vmem [#allocation2], %s1072
    %v1074 = vld [vmem:[%s1073] sm:$0xff]
    %v1075 = vld [vmem:[%s1073 + $0x8] sm:$0xff]
    %v1077 = vsel %vm290, %v1065, 0
    %1079 = vmatprep.subr.mxu0 %v263
    %1080 = vmatpush1.msra.mxu0 %v262
    %1081 = vmatprep.subr.mxu0 %v265
    %1082 = vmatpush1.msra.mxu0 %v264
    %1083 = vmatprep.subr.mxu0 %v267
    %1084 = vmatpush1.msra.mxu0 %v266
    %1085 = vmatprep.subr.mxu0 %v269
    %1086 = vmatpush1.msra.mxu0 %v268
    %1087 = vmatprep.subr.mxu0 %v271
    %1088 = vmatpush1.msra.mxu0 %v270
    %1089 = vmatprep.subr.mxu0 %v273
    %1090 = vmatpush1.msra.mxu0 %v272
    %1091 = vmatprep.subr.mxu0 %v275
    %1092 = vmatpush1.msra.mxu0 %v274
    %1093 = vmatprep.subr.mxu0 %v277
    %1094 = vmatpush1.msra.mxu0 %v276
    %1095 = vmatprep.subr.mxu0 0.0
    %1096 = vmatpush1.msra.mxu0 0.0
    %1097 = vmatprep.subr.mxu0 0.0
    %1098 = vmatpush1.msra.mxu0 0.0
    %1099 = vmatprep.subr.mxu0 0.0
    %1100 = vmatpush1.msra.mxu0 0.0
    %1101 = vmatprep.subr.mxu0 0.0
    %1102 = vmatpush1.msra.mxu0 0.0
    %1103 = vmatprep.subr.mxu0 0.0
    %1104 = vmatpush1.msra.mxu0 0.0
    %1105 = vmatprep.subr.mxu0 0.0
    %1106 = vmatpush1.msra.mxu0 0.0
    %1107 = vmatprep.subr.mxu0 0.0
    %1108 = vmatpush1.msra.mxu0 0.0
    %1109 = vmatprep.subr.mxu0 0.0
    %1110 = vmatpush1.msra.mxu0 0.0
    %1111 = vmatprep.subr.mxu0 0.0
    %1112 = vmatpush1.msra.mxu0 0.0
    %1113 = vmatprep.subr.mxu0 0.0
    %1114 = vmatpush1.msra.mxu0 0.0
    %1115 = vmatprep.subr.mxu0 0.0
    %1116 = vmatpush1.msra.mxu0 0.0
    %1117 = vmatprep.subr.mxu0 0.0
    %1118 = vmatpush1.msra.mxu0 0.0
    %1119 = vmatprep.subr.mxu0 0.0
    %1120 = vmatpush1.msra.mxu0 0.0
    %1121 = vmatprep.subr.mxu0 0.0
    %1122 = vmatpush1.msra.mxu0 0.0
    %1123 = vmatprep.subr.mxu0 0.0
    %1124 = vmatpush1.msra.mxu0 0.0
    %1125 = vmatprep.subr.mxu0 0.0
    %1126 = vmatpush1.msra.mxu0 0.0
    %1127 = vmatprep.subr.mxu0 0.0
    %1128 = vmatpush1.msra.mxu0 0.0
    %1129 = vmatprep.subr.mxu0 0.0
    %1130 = vmatpush1.msra.mxu0 0.0
    %1131 = vmatprep.subr.mxu0 0.0
    %1132 = vmatpush1.msra.mxu0 0.0
    %1133 = vmatprep.subr.mxu0 0.0
    %1134 = vmatpush1.msra.mxu0 0.0
    %1135 = vmatprep.subr.mxu0 0.0
    %1136 = vmatpush1.msra.mxu0 0.0
    %1137 = vmatprep.subr.mxu0 0.0
    %1138 = vmatpush1.msra.mxu0 0.0
    %1139 = vmatprep.subr.mxu0 0.0
    %1140 = vmatpush1.msra.mxu0 0.0
    %1141 = vmatprep.subr.mxu0 0.0
    %1142 = vmatpush1.msra.mxu0 0.0
    %1143 = vmatprep.mubr.f32.mxu0 0.0
    %1144 = vmatmul.mubr.f32.gmra.mrb[0].mxu0 %v1077
    %v1145 = vpop.f32.mrb[0].mxu0
    %v1146 = vadd.f32 0.0, %v1145
    %v1147 = vpop.f32.mrb[0].mxu0
    %v1148 = vadd.f32 0.0, %v1147
    %1149 = vdwg.mxu0
    %v1150 = vadd.f32 %v1074, %v1146
    %v1151 = vadd.f32 %v1075, %v1148
    %v1152 = vxor.u32 %v1150, 2147483648
    %v1153 = vxor.u32 %v1151, 2147483648
    %v1154 = vmul.f32 %v1152, 1.442695
    %v1155 = vpow.pop %v1154
    %v1156 = vmul.f32 %v1153, 1.442695
    %v1157 = vpow.pop %v1156
    %v1158 = vadd.f32 %v1155, 1.0
    %v1159 = vadd.f32 %v1157, 1.0
    %v1160 = vrcp.pop %v1158
    %v1161 = vmul.f32 1.0, %v1160
    %v1162 = vrcp.pop %v1159
    %v1163 = vmul.f32 1.0, %v1162
    %v1164 = vtanh.pop %v1151
    %1166 = vrot.lane.b32.xlu0 %v1070, 64
    %v1167 = vpop.permute.xlu0 %1166
    %v1169 = vmul.f32 %v1161, %v1167
    %1171 = vrot.lane.b32.xlu0 %v1164, 64
    %v1172 = vpop.permute.xlu0 %1171
    %v1174 = vmul.f32 %v1161, %v1172
    %1176 = vrot.lane.b32.xlu0 %v1174, 64
    %v1177 = vpop.permute.xlu0 %1176
    %v1179 = vadd.f32 %v1169, %v1177
    %v1180 = vtanh.pop %v1179
    %1182 = vrot.lane.b32.xlu0 %v1180, 64
    %v1183 = vpop.permute.xlu0 %1182
    %v1185 = vmul.f32 %v1163, %v1183
    %v1186 = vsel %vm284, 6, 1
    %vm1187 = vcmp.lt.s32.totalorder %v1186, %v281
    %v1188 = vsel %vm1187, %v1185, 0.0
    %s1189 = scalar_lea.vmem [#allocation3], 48
    %1190 = vst.msk [vmem:[%s1189] sm:$0xff] %vm108, %v1188
    %1192 = vrot.lane.b32.xlu0 %v1188, 96
    %v1193 = vpop.permute.xlu0 %1192
    %s1195 = scalar_lea.vmem [#allocation4], 8
    %1196 = vst.msk [vmem:[%s1195] sm:$0xff] %vm108, %v1193
    %v1197 = vsel %vm1187, %v1185, %v1065
    %1199 = vrot.lane.b32.xlu0 %v1179, 64
    %v1200 = vpop.permute.xlu0 %1199
    %v1202 = vsel %vm1187, %v1200, %v1070
    %s1203 = smul.u32 7, 2
    %s1204 = smul.addr %s1203, 8
    %s1205 = scalar_lea.vmem [#allocation2], %s1204
    %v1206 = vld [vmem:[%s1205] sm:$0xff]
    %v1207 = vld [vmem:[%s1205 + $0x8] sm:$0xff]
    %v1209 = vsel %vm290, %v1197, 0
    %1211 = vmatprep.subr.mxu0 %v263
    %1212 = vmatpush1.msra.mxu0 %v262
    %1213 = vmatprep.subr.mxu0 %v265
    %1214 = vmatpush1.msra.mxu0 %v264
    %1215 = vmatprep.subr.mxu0 %v267
    %1216 = vmatpush1.msra.mxu0 %v266
    %1217 = vmatprep.subr.mxu0 %v269
    %1218 = vmatpush1.msra.mxu0 %v268
    %1219 = vmatprep.subr.mxu0 %v271
    %1220 = vmatpush1.msra.mxu0 %v270
    %1221 = vmatprep.subr.mxu0 %v273
    %1222 = vmatpush1.msra.mxu0 %v272
    %1223 = vmatprep.subr.mxu0 %v275
    %1224 = vmatpush1.msra.mxu0 %v274
    %1225 = vmatprep.subr.mxu0 %v277
    %1226 = vmatpush1.msra.mxu0 %v276
    %1227 = vmatprep.subr.mxu0 0.0
    %1228 = vmatpush1.msra.mxu0 0.0
    %1229 = vmatprep.subr.mxu0 0.0
    %1230 = vmatpush1.msra.mxu0 0.0
    %1231 = vmatprep.subr.mxu0 0.0
    %1232 = vmatpush1.msra.mxu0 0.0
    %1233 = vmatprep.subr.mxu0 0.0
    %1234 = vmatpush1.msra.mxu0 0.0
    %1235 = vmatprep.subr.mxu0 0.0
    %1236 = vmatpush1.msra.mxu0 0.0
    %1237 = vmatprep.subr.mxu0 0.0
    %1238 = vmatpush1.msra.mxu0 0.0
    %1239 = vmatprep.subr.mxu0 0.0
    %1240 = vmatpush1.msra.mxu0 0.0
    %1241 = vmatprep.subr.mxu0 0.0
    %1242 = vmatpush1.msra.mxu0 0.0
    %1243 = vmatprep.subr.mxu0 0.0
    %1244 = vmatpush1.msra.mxu0 0.0
    %1245 = vmatprep.subr.mxu0 0.0
    %1246 = vmatpush1.msra.mxu0 0.0
    %1247 = vmatprep.subr.mxu0 0.0
    %1248 = vmatpush1.msra.mxu0 0.0
    %1249 = vmatprep.subr.mxu0 0.0
    %1250 = vmatpush1.msra.mxu0 0.0
    %1251 = vmatprep.subr.mxu0 0.0
    %1252 = vmatpush1.msra.mxu0 0.0
    %1253 = vmatprep.subr.mxu0 0.0
    %1254 = vmatpush1.msra.mxu0 0.0
    %1255 = vmatprep.subr.mxu0 0.0
    %1256 = vmatpush1.msra.mxu0 0.0
    %1257 = vmatprep.subr.mxu0 0.0
    %1258 = vmatpush1.msra.mxu0 0.0
    %1259 = vmatprep.subr.mxu0 0.0
    %1260 = vmatpush1.msra.mxu0 0.0
    %1261 = vmatprep.subr.mxu0 0.0
    %1262 = vmatpush1.msra.mxu0 0.0
    %1263 = vmatprep.subr.mxu0 0.0
    %1264 = vmatpush1.msra.mxu0 0.0
    %1265 = vmatprep.subr.mxu0 0.0
    %1266 = vmatpush1.msra.mxu0 0.0
    %1267 = vmatprep.subr.mxu0 0.0
    %1268 = vmatpush1.msra.mxu0 0.0
    %1269 = vmatprep.subr.mxu0 0.0
    %1270 = vmatpush1.msra.mxu0 0.0
    %1271 = vmatprep.subr.mxu0 0.0
    %1272 = vmatpush1.msra.mxu0 0.0
    %1273 = vmatprep.subr.mxu0 0.0
    %1274 = vmatpush1.msra.mxu0 0.0
    %1275 = vmatprep.mubr.f32.mxu0 0.0
    %1276 = vmatmul.mubr.f32.gmra.mrb[0].mxu0 %v1209
    %v1277 = vpop.f32.mrb[0].mxu0
    %v1278 = vadd.f32 0.0, %v1277
    %v1279 = vpop.f32.mrb[0].mxu0
    %v1280 = vadd.f32 0.0, %v1279
    %1281 = vdwg.mxu0
    %v1282 = vadd.f32 %v1206, %v1278
    %v1283 = vadd.f32 %v1207, %v1280
    %v1284 = vxor.u32 %v1282, 2147483648
    %v1285 = vxor.u32 %v1283, 2147483648
    %v1286 = vmul.f32 %v1284, 1.442695
    %v1287 = vpow.pop %v1286
    %v1288 = vmul.f32 %v1285, 1.442695
    %v1289 = vpow.pop %v1288
    %v1290 = vadd.f32 %v1287, 1.0
    %v1291 = vadd.f32 %v1289, 1.0
    %v1292 = vrcp.pop %v1290
    %v1293 = vmul.f32 1.0, %v1292
    %v1294 = vrcp.pop %v1291
    %v1295 = vmul.f32 1.0, %v1294
    %v1296 = vtanh.pop %v1283
    %1298 = vrot.lane.b32.xlu0 %v1202, 64
    %v1299 = vpop.permute.xlu0 %1298
    %v1301 = vmul.f32 %v1293, %v1299
    %1303 = vrot.lane.b32.xlu0 %v1296, 64
    %v1304 = vpop.permute.xlu0 %1303
    %v1306 = vmul.f32 %v1293, %v1304
    %1308 = vrot.lane.b32.xlu0 %v1306, 64
    %v1309 = vpop.permute.xlu0 %1308
    %v1311 = vadd.f32 %v1301, %v1309
    %v1312 = vtanh.pop %v1311
    %1314 = vrot.lane.b32.xlu0 %v1312, 64
    %v1315 = vpop.permute.xlu0 %1314
    %v1317 = vmul.f32 %v1295, %v1315
    %v1318 = vsel %vm284, 7, 0
    %vm1319 = vcmp.lt.s32.totalorder %v1318, %v281
    %v1320 = vsel %vm1319, %v1317, 0.0
    %s1321 = scalar_lea.vmem [#allocation3], 56
    %1322 = vst.msk [vmem:[%s1321] sm:$0xff] %vm108, %v1320
    %1324 = vrot.lane.b32.xlu0 %v1320, 96
    %v1325 = vpop.permute.xlu0 %1324
    %1327 = vst.msk [vmem:[#allocation4] sm:$0xff] %vm108, %v1325
    %v1328 = vsel %vm1319, %v1317, %v1197
    %v1329 = vld [vmem:[#allocation3] sm:$0xff]
    %v1330 = vld [vmem:[#allocation3 + $0x8] sm:$0xff]
    %v1331 = vld [vmem:[#allocation3 + $0x10] sm:$0xff]
    %v1332 = vld [vmem:[#allocation3 + $0x18] sm:$0xff]
    %v1333 = vld [vmem:[#allocation3 + $0x20] sm:$0xff]
    %v1334 = vld [vmem:[#allocation3 + $0x28] sm:$0xff]
    %v1335 = vld [vmem:[#allocation3 + $0x30] sm:$0xff]
    %v1336 = vld [vmem:[#allocation3 + $0x38] sm:$0xff]
    %v1337 = vld [vmem:[#allocation8] sm:$0xff]
    %v1338 = vld [vmem:[#allocation8 + $0x8] sm:$0xff]
    %v1339 = vld [vmem:[#allocation8 + $0x10] sm:$0xff]
    %v1340 = vld [vmem:[#allocation8 + $0x18] sm:$0xff]
    %v1341 = vld [vmem:[#allocation4] sm:$0xff]
    %v1342 = vld [vmem:[#allocation4 + $0x8] sm:$0xff]
    %v1343 = vld [vmem:[#allocation4 + $0x10] sm:$0xff]
    %v1344 = vld [vmem:[#allocation4 + $0x18] sm:$0xff]
    %v1345 = vld [vmem:[#allocation4 + $0x20] sm:$0xff]
    %v1346 = vld [vmem:[#allocation4 + $0x28] sm:$0xff]
    %v1347 = vld [vmem:[#allocation4 + $0x30] sm:$0xff]
    %v1348 = vld [vmem:[#allocation4 + $0x38] sm:$0xff]
    %v1349 = vld [vmem:[#allocation10] sm:$0xff]
    %v1350 = vld [vmem:[#allocation10 + $0x8] sm:$0xff]
    %v1351 = vld [vmem:[#allocation10 + $0x10] sm:$0xff]
    %v1352 = vld [vmem:[#allocation10 + $0x18] sm:$0xff]
    %v1354 = vsel %vm108, %v1341, 0
    %v1357 = vsel %vm108, %v1342, 0
    %v1360 = vsel %vm108, %v1343, 0
    %v1363 = vsel %vm108, %v1344, 0
    %v1366 = vsel %vm108, %v1345, 0
    %v1369 = vsel %vm108, %v1346, 0
    %v1372 = vsel %vm108, %v1347, 0
    %v1375 = vsel %vm108, %v1348, 0
    %1377 = vmatprep.subr.mxu0 0.0
    %1378 = vmatpush1.msra.mxu0 %v1349
    %1379 = vmatprep.subr.mxu0 0.0
    %1380 = vmatpush1.msra.mxu0 %v1350
    %1381 = vmatprep.subr.mxu0 0.0
    %1382 = vmatpush1.msra.mxu0 %v1351
    %1383 = vmatprep.subr.mxu0 0.0
    %1384 = vmatpush1.msra.mxu0 %v1352
    %1385 = vmatprep.subr.mxu0 0.0
    %1386 = vmatpush1.msra.mxu0 0.0
    %1387 = vmatprep.subr.mxu0 0.0
    %1388 = vmatpush1.msra.mxu0 0.0
    %1389 = vmatprep.subr.mxu0 0.0
    %1390 = vmatpush1.msra.mxu0 0.0
    %1391 = vmatprep.subr.mxu0 0.0
    %1392 = vmatpush1.msra.mxu0 0.0
    %1393 = vmatprep.subr.mxu0 0.0
    %1394 = vmatpush1.msra.mxu0 0.0
    %1395 = vmatprep.subr.mxu0 0.0
    %1396 = vmatpush1.msra.mxu0 0.0
    %1397 = vmatprep.subr.mxu0 0.0
    %1398 = vmatpush1.msra.mxu0 0.0
    %1399 = vmatprep.subr.mxu0 0.0
    %1400 = vmatpush1.msra.mxu0 0.0
    %1401 = vmatprep.subr.mxu0 0.0
    %1402 = vmatpush1.msra.mxu0 0.0
    %1403 = vmatprep.subr.mxu0 0.0
    %1404 = vmatpush1.msra.mxu0 0.0
    %1405 = vmatprep.subr.mxu0 0.0
    %1406 = vmatpush1.msra.mxu0 0.0
    %1407 = vmatprep.subr.mxu0 0.0
    %1408 = vmatpush1.msra.mxu0 0.0
    %1409 = vmatprep.subr.mxu0 0.0
    %1410 = vmatpush1.msra.mxu0 0.0
    %1411 = vmatprep.subr.mxu0 0.0
    %1412 = vmatpush1.msra.mxu0 0.0
    %1413 = vmatprep.subr.mxu0 0.0
    %1414 = vmatpush1.msra.mxu0 0.0
    %1415 = vmatprep.subr.mxu0 0.0
    %1416 = vmatpush1.msra.mxu0 0.0
    %1417 = vmatprep.subr.mxu0 0.0
    %1418 = vmatpush1.msra.mxu0 0.0
    %1419 = vmatprep.subr.mxu0 0.0
    %1420 = vmatpush1.msra.mxu0 0.0
    %1421 = vmatprep.subr.mxu0 0.0
    %1422 = vmatpush1.msra.mxu0 0.0
    %1423 = vmatprep.subr.mxu0 0.0
    %1424 = vmatpush1.msra.mxu0 0.0
    %1425 = vmatprep.subr.mxu0 0.0
    %1426 = vmatpush1.msra.mxu0 0.0
    %1427 = vmatprep.subr.mxu0 0.0
    %1428 = vmatpush1.msra.mxu0 0.0
    %1429 = vmatprep.subr.mxu0 0.0
    %1430 = vmatpush1.msra.mxu0 0.0
    %1431 = vmatprep.subr.mxu0 0.0
    %1432 = vmatpush1.msra.mxu0 0.0
    %1433 = vmatprep.subr.mxu0 0.0
    %1434 = vmatpush1.msra.mxu0 0.0
    %1435 = vmatprep.subr.mxu0 0.0
    %1436 = vmatpush1.msra.mxu0 0.0
    %1437 = vmatprep.subr.mxu0 0.0
    %1438 = vmatpush1.msra.mxu0 0.0
    %1439 = vmatprep.subr.mxu0 0.0
    %1440 = vmatpush1.msra.mxu0 0.0
    %1441 = vmatprep.mubr.f32.mxu0 0.0
    %1442 = vmatmul.mubr.f32.gmra.mrb[0].mxu0 %v1354
    %v1443 = vpop.f32.mrb[0].mxu0
    %v1444 = vadd.f32 0.0, %v1443
    %v1445 = vpop.f32.mrb[0].mxu0
    %1446 = vmatprep.mubr.f32.mxu0 0.0
    %1447 = vmatmul.mubr.f32.gmra.mrb[0].mxu0 %v1357
    %v1448 = vpop.f32.mrb[0].mxu0
    %v1449 = vadd.f32 0.0, %v1448
    %v1450 = vpop.f32.mrb[0].mxu0
    %1451 = vmatprep.mubr.f32.mxu0 0.0
    %1452 = vmatmul.mubr.f32.gmra.mrb[0].mxu0 %v1360
    %v1453 = vpop.f32.mrb[0].mxu0
    %v1454 = vadd.f32 0.0, %v1453
    %v1455 = vpop.f32.mrb[0].mxu0
    %1456 = vmatprep.mubr.f32.mxu0 0.0
    %1457 = vmatmul.mubr.f32.gmra.mrb[0].mxu0 %v1363
    %v1458 = vpop.f32.mrb[0].mxu0
    %v1459 = vadd.f32 0.0, %v1458
    %v1460 = vpop.f32.mrb[0].mxu0
    %1461 = vmatprep.mubr.f32.mxu0 0.0
    %1462 = vmatmul.mubr.f32.gmra.mrb[0].mxu0 %v1366
    %v1463 = vpop.f32.mrb[0].mxu0
    %v1464 = vadd.f32 0.0, %v1463
    %v1465 = vpop.f32.mrb[0].mxu0
    %1466 = vmatprep.mubr.f32.mxu0 0.0
    %1467 = vmatmul.mubr.f32.gmra.mrb[0].mxu0 %v1369
    %v1468 = vpop.f32.mrb[0].mxu0
    %v1469 = vadd.f32 0.0, %v1468
    %v1470 = vpop.f32.mrb[0].mxu0
    %1471 = vmatprep.mubr.f32.mxu0 0.0
    %1472 = vmatmul.mubr.f32.gmra.mrb[0].mxu0 %v1372
    %v1473 = vpop.f32.mrb[0].mxu0
    %v1474 = vadd.f32 0.0, %v1473
    %v1475 = vpop.f32.mrb[0].mxu0
    %1476 = vmatprep.mubr.f32.mxu0 0.0
    %1477 = vmatmul.mubr.f32.gmra.mrb[0].mxu0 %v1375
    %v1478 = vpop.f32.mrb[0].mxu0
    %v1479 = vadd.f32 0.0, %v1478
    %v1480 = vpop.f32.mrb[0].mxu0
    %1481 = vdwg.mxu0
    %v1483 = vsel %vm108, %v1329, 0
    %v1486 = vsel %vm108, %v1330, 0
    %v1489 = vsel %vm108, %v1331, 0
    %v1492 = vsel %vm108, %v1332, 0
    %v1495 = vsel %vm108, %v1333, 0
    %v1498 = vsel %vm108, %v1334, 0
    %v1501 = vsel %vm108, %v1335, 0
    %v1504 = vsel %vm108, %v1336, 0
    %1506 = vmatprep.subr.mxu0 0.0
    %1507 = vmatpush1.msra.mxu0 %v1337
    %1508 = vmatprep.subr.mxu0 0.0
    %1509 = vmatpush1.msra.mxu0 %v1338
    %1510 = vmatprep.subr.mxu0 0.0
    %1511 = vmatpush1.msra.mxu0 %v1339
    %1512 = vmatprep.subr.mxu0 0.0
    %1513 = vmatpush1.msra.mxu0 %v1340
    %1514 = vmatprep.subr.mxu0 0.0
    %1515 = vmatpush1.msra.mxu0 0.0
    %1516 = vmatprep.subr.mxu0 0.0
    %1517 = vmatpush1.msra.mxu0 0.0
    %1518 = vmatprep.subr.mxu0 0.0
    %1519 = vmatpush1.msra.mxu0 0.0
    %1520 = vmatprep.subr.mxu0 0.0
    %1521 = vmatpush1.msra.mxu0 0.0
    %1522 = vmatprep.subr.mxu0 0.0
    %1523 = vmatpush1.msra.mxu0 0.0
    %1524 = vmatprep.subr.mxu0 0.0
    %1525 = vmatpush1.msra.mxu0 0.0
    %1526 = vmatprep.subr.mxu0 0.0
    %1527 = vmatpush1.msra.mxu0 0.0
    %1528 = vmatprep.subr.mxu0 0.0
    %1529 = vmatpush1.msra.mxu0 0.0
    %1530 = vmatprep.subr.mxu0 0.0
    %1531 = vmatpush1.msra.mxu0 0.0
    %1532 = vmatprep.subr.mxu0 0.0
    %1533 = vmatpush1.msra.mxu0 0.0
    %1534 = vmatprep.subr.mxu0 0.0
    %1535 = vmatpush1.msra.mxu0 0.0
    %1536 = vmatprep.subr.mxu0 0.0
    %1537 = vmatpush1.msra.mxu0 0.0
    %1538 = vmatprep.subr.mxu0 0.0
    %1539 = vmatpush1.msra.mxu0 0.0
    %1540 = vmatprep.subr.mxu0 0.0
    %1541 = vmatpush1.msra.mxu0 0.0
    %1542 = vmatprep.subr.mxu0 0.0
    %1543 = vmatpush1.msra.mxu0 0.0
    %1544 = vmatprep.subr.mxu0 0.0
    %1545 = vmatpush1.msra.mxu0 0.0
    %1546 = vmatprep.subr.mxu0 0.0
    %1547 = vmatpush1.msra.mxu0 0.0
    %1548 = vmatprep.subr.mxu0 0.0
    %1549 = vmatpush1.msra.mxu0 0.0
    %1550 = vmatprep.subr.mxu0 0.0
    %1551 = vmatpush1.msra.mxu0 0.0
    %1552 = vmatprep.subr.mxu0 0.0
    %1553 = vmatpush1.msra.mxu0 0.0
    %1554 = vmatprep.subr.mxu0 0.0
    %1555 = vmatpush1.msra.mxu0 0.0
    %1556 = vmatprep.subr.mxu0 0.0
    %1557 = vmatpush1.msra.mxu0 0.0
    %1558 = vmatprep.subr.mxu0 0.0
    %1559 = vmatpush1.msra.mxu0 0.0
    %1560 = vmatprep.subr.mxu0 0.0
    %1561 = vmatpush1.msra.mxu0 0.0
    %1562 = vmatprep.subr.mxu0 0.0
    %1563 = vmatpush1.msra.mxu0 0.0
    %1564 = vmatprep.subr.mxu0 0.0
    %1565 = vmatpush1.msra.mxu0 0.0
    %1566 = vmatprep.subr.mxu0 0.0
    %1567 = vmatpush1.msra.mxu0 0.0
    %1568 = vmatprep.subr.mxu0 0.0
    %1569 = vmatpush1.msra.mxu0 0.0
    %1570 = vmatprep.mubr.f32.mxu0 0.0
    %1571 = vmatmul.mubr.f32.gmra.mrb[0].mxu0 %v1483
    %v1572 = vpop.f32.mrb[0].mxu0
    %v1573 = vadd.f32 %v1444, %v1572
    %v1574 = vpop.f32.mrb[0].mxu0
    %1575 = vmatprep.mubr.f32.mxu0 0.0
    %1576 = vmatmul.mubr.f32.gmra.mrb[0].mxu0 %v1486
    %v1577 = vpop.f32.mrb[0].mxu0
    %v1578 = vadd.f32 %v1449, %v1577
    %v1579 = vpop.f32.mrb[0].mxu0
    %1580 = vmatprep.mubr.f32.mxu0 0.0
    %1581 = vmatmul.mubr.f32.gmra.mrb[0].mxu0 %v1489
    %v1582 = vpop.f32.mrb[0].mxu0
    %v1583 = vadd.f32 %v1454, %v1582
    %v1584 = vpop.f32.mrb[0].mxu0
    %1585 = vmatprep.mubr.f32.mxu0 0.0
    %1586 = vmatmul.mubr.f32.gmra.mrb[0].mxu0 %v1492
    %v1587 = vpop.f32.mrb[0].mxu0
    %v1588 = vadd.f32 %v1459, %v1587
    %v1589 = vpop.f32.mrb[0].mxu0
    %1590 = vmatprep.mubr.f32.mxu0 0.0
    %1591 = vmatmul.mubr.f32.gmra.mrb[0].mxu0 %v1495
    %v1592 = vpop.f32.mrb[0].mxu0
    %v1593 = vadd.f32 %v1464, %v1592
    %v1594 = vpop.f32.mrb[0].mxu0
    %1595 = vmatprep.mubr.f32.mxu0 0.0
    %1596 = vmatmul.mubr.f32.gmra.mrb[0].mxu0 %v1498
    %v1597 = vpop.f32.mrb[0].mxu0
    %v1598 = vadd.f32 %v1469, %v1597
    %v1599 = vpop.f32.mrb[0].mxu0
    %1600 = vmatprep.mubr.f32.mxu0 0.0
    %1601 = vmatmul.mubr.f32.gmra.mrb[0].mxu0 %v1501
    %v1602 = vpop.f32.mrb[0].mxu0
    %v1603 = vadd.f32 %v1474, %v1602
    %v1604 = vpop.f32.mrb[0].mxu0
    %1605 = vmatprep.mubr.f32.mxu0 0.0
    %1606 = vmatmul.mubr.f32.gmra.mrb[0].mxu0 %v1504
    %v1607 = vpop.f32.mrb[0].mxu0
    %v1608 = vadd.f32 %v1479, %v1607
    %v1609 = vpop.f32.mrb[0].mxu0
    %1610 = vdwg.mxu0
    %v1611 = vld [vmem:[%s7] sm:$0x1]
    %v1613 = vlaneseq
    %v1614 = vshrl.u32 %v1613, 7
    %v1615 = vsub.s32 0, %v1614
    %v1616 = vrot.slane %v1611, %v1615
    %v1618 = vadd.f32 %v1573, %v1616
    %v1619 = vadd.f32 %v1578, %v1616
    %v1620 = vadd.f32 %v1583, %v1616
    %v1621 = vadd.f32 %v1588, %v1616
    %v1622 = vadd.f32 %v1593, %v1616
    %v1623 = vadd.f32 %v1598, %v1616
    %v1624 = vadd.f32 %v1603, %v1616
    %v1625 = vadd.f32 %v1608, %v1616
    %1626 = vst [vmem:[#allocation11] sm:$0xff] %v1618
    %1627 = vst [vmem:[#allocation11 + $0x8] sm:$0xff] %v1619
    %1628 = vst [vmem:[#allocation11 + $0x10] sm:$0xff] %v1620
    %1629 = vst [vmem:[#allocation11 + $0x18] sm:$0xff] %v1621
    %1630 = vst [vmem:[#allocation11 + $0x20] sm:$0xff] %v1622
    %1631 = vst [vmem:[#allocation11 + $0x28] sm:$0xff] %v1623
    %1632 = vst [vmem:[#allocation11 + $0x30] sm:$0xff] %v1624
    %1633 = vst [vmem:[#allocation11 + $0x38] sm:$0xff] %v1625
    %v1634 = vld [vmem:[%s8] sm:$0xff]
    %v1635 = vld [vmem:[%s8 + $0x8] sm:$0xff]
    %v1636 = vld [vmem:[%s8 + $0x10] sm:$0xff]
    %v1637 = vld [vmem:[%s8 + $0x18] sm:$0xff]
    %v1638 = vld [vmem:[%s8 + $0x20] sm:$0xff]
    %v1639 = vld [vmem:[%s8 + $0x28] sm:$0xff]
    %v1640 = vld [vmem:[%s8 + $0x30] sm:$0xff]
    %v1641 = vld [vmem:[%s8 + $0x38] sm:$0xff]
    %v1642 = vld [vmem:[%s9] sm:$0x1]
    %v1644 = vlaneseq
    %v1645 = vshrl.u32 %v1644, 7
    %v1646 = vsub.s32 0, %v1645
    %v1647 = vrot.slane %v1642, %v1646
    %v1650 = vsel %vm290, %v1328, 0
    %1652 = vmatprep.subr.mxu0 0.0
    %1653 = vmatpush1.msra.mxu0 %v1634
    %1654 = vmatprep.subr.mxu0 0.0
    %1655 = vmatpush1.msra.mxu0 %v1635
    %1656 = vmatprep.subr.mxu0 0.0
    %1657 = vmatpush1.msra.mxu0 %v1636
    %1658 = vmatprep.subr.mxu0 0.0
    %1659 = vmatpush1.msra.mxu0 %v1637
    %1660 = vmatprep.subr.mxu0 0.0
    %1661 = vmatpush1.msra.mxu0 %v1638
    %1662 = vmatprep.subr.mxu0 0.0
    %1663 = vmatpush1.msra.mxu0 %v1639
    %1664 = vmatprep.subr.mxu0 0.0
    %1665 = vmatpush1.msra.mxu0 %v1640
    %1666 = vmatprep.subr.mxu0 0.0
    %1667 = vmatpush1.msra.mxu0 %v1641
    %1668 = vmatprep.subr.mxu0 0.0
    %1669 = vmatpush1.msra.mxu0 0.0
    %1670 = vmatprep.subr.mxu0 0.0
    %1671 = vmatpush1.msra.mxu0 0.0
    %1672 = vmatprep.subr.mxu0 0.0
    %1673 = vmatpush1.msra.mxu0 0.0
    %1674 = vmatprep.subr.mxu0 0.0
    %1675 = vmatpush1.msra.mxu0 0.0
    %1676 = vmatprep.subr.mxu0 0.0
    %1677 = vmatpush1.msra.mxu0 0.0
    %1678 = vmatprep.subr.mxu0 0.0
    %1679 = vmatpush1.msra.mxu0 0.0
    %1680 = vmatprep.subr.mxu0 0.0
    %1681 = vmatpush1.msra.mxu0 0.0
    %1682 = vmatprep.subr.mxu0 0.0
    %1683 = vmatpush1.msra.mxu0 0.0
    %1684 = vmatprep.subr.mxu0 0.0
    %1685 = vmatpush1.msra.mxu0 0.0
    %1686 = vmatprep.subr.mxu0 0.0
    %1687 = vmatpush1.msra.mxu0 0.0
    %1688 = vmatprep.subr.mxu0 0.0
    %1689 = vmatpush1.msra.mxu0 0.0
    %1690 = vmatprep.subr.mxu0 0.0
    %1691 = vmatpush1.msra.mxu0 0.0
    %1692 = vmatprep.subr.mxu0 0.0
    %1693 = vmatpush1.msra.mxu0 0.0
    %1694 = vmatprep.subr.mxu0 0.0
    %1695 = vmatpush1.msra.mxu0 0.0
    %1696 = vmatprep.subr.mxu0 0.0
    %1697 = vmatpush1.msra.mxu0 0.0
    %1698 = vmatprep.subr.mxu0 0.0
    %1699 = vmatpush1.msra.mxu0 0.0
    %1700 = vmatprep.subr.mxu0 0.0
    %1701 = vmatpush1.msra.mxu0 0.0
    %1702 = vmatprep.subr.mxu0 0.0
    %1703 = vmatpush1.msra.mxu0 0.0
    %1704 = vmatprep.subr.mxu0 0.0
    %1705 = vmatpush1.msra.mxu0 0.0
    %1706 = vmatprep.subr.mxu0 0.0
    %1707 = vmatpush1.msra.mxu0 0.0
    %1708 = vmatprep.subr.mxu0 0.0
    %1709 = vmatpush1.msra.mxu0 0.0
    %1710 = vmatprep.subr.mxu0 0.0
    %1711 = vmatpush1.msra.mxu0 0.0
    %1712 = vmatprep.subr.mxu0 0.0
    %1713 = vmatpush1.msra.mxu0 0.0
    %1714 = vmatprep.subr.mxu0 0.0
    %1715 = vmatpush1.msra.mxu0 0.0
    %1716 = vmatprep.mubr.f32.mxu0 0.0
    %1717 = vmatmul.mubr.f32.gmra.mrb[0].mxu0 %v1650
    %v1718 = vpop.f32.mrb[0].mxu0
    %v1719 = vadd.f32 %v1647, %v1718
    %v1720 = vpop.f32.mrb[0].mxu0
    %1721 = vdwg.mxu0
    %1722 = vst [vmem:[#allocation12] sm:$0xff] %v1719
    // Predicated region
    $region54: #{tpu_custom_call.1} parent=1 // pred_check
      _
    $region55: #{tpu_custom_call.1} parent=1 // pred_check_branch
      %1724 = sbr.rel (0) target = $region57
    $region56: #{tpu_custom_call.1} parent=1 // pred_region
      %s1726 = ssub.s32 1024, 1024
      %1727 = vsyncadd [#allocation7], %s1726
      %s1728 = sshll.u32 [#allocation11], 4
      %s1729 = int_to_ptr.vmem [resolvable:$true] %s1728
      %1734 = dma.vmem_to_hbm [thread:$0]  %s1729, 1024, %s10, [#allocation7], 128, 128, 8
    $region57: #{tpu_custom_call.1} parent=1 // pred_fallthru
      _
    // Predicated region
    $region58: #{tpu_custom_call.1} parent=1 // pred_check
      _
    $region59: #{tpu_custom_call.1} parent=1 // pred_check_branch
      %1736 = sbr.rel (0) target = $region61
    $region60: #{tpu_custom_call.1} parent=1 // pred_region
      %s1738 = ssub.s32 128, 128
      %1739 = vsyncadd [#allocation13], %s1738
      %s1741 = sshll.u32 [#allocation12], 4
      %s1742 = int_to_ptr.vmem [resolvable:$true] %s1741
      %1744 = dma.vmem_to_hbm [thread:$0]  %s1742, 128, %s11, [#allocation13]
    $region61: #{tpu_custom_call.1} parent=1 // pred_fallthru
      _
    // Predicated region
    $region62: #{tpu_custom_call.1} parent=1 // pred_check
      _
    $region63: #{tpu_custom_call.1} parent=1 // pred_check_branch
      %1746 = sbr.rel (0) target = $region65
    $region64: #{tpu_custom_call.1} parent=1 // pred_region
      %1747 = dma.done [#allocation7], 1024
    $region65: #{tpu_custom_call.1} parent=1 // pred_fallthru
      _
    // Predicated region
    $region66: #{tpu_custom_call.1} parent=1 // pred_check
      _
    $region67: #{tpu_custom_call.1} parent=1 // pred_check_branch
      %1749 = sbr.rel (0) target = $region69
    $region68: #{tpu_custom_call.1} parent=1 // pred_region
      %1750 = dma.done [#allocation13], 128
    $region69: #{tpu_custom_call.1} parent=1 // pred_fallthru
      _
    %1751 = vsyncpa [#allocation6], 1
    %1752 = vsyncpa [#allocation9], 1
    %1753 = vsyncpa [#allocation7], 1
    %1754 = vsyncpa [#allocation13], 1

</llo_original>
